<compile_context>
chip_gen: v7x
topology: tpu7x:2x2x1
jax: 0.10.0
libtpu: 0.0.40
codegen_flags: <defaults>
</compile_context>

<pallas_src>
import jax
import jax.numpy as jnp
from jax.experimental import pallas as pl
from jax.experimental.pallas import tpu as pltpu


def _nonlocal_kernel(x_ref,       # (1, TQ, C)    f32 NHWC-flat query tile
                     phi_ref,     # (1, NPp, Ci)  bf16 pooled phi keys
                     g_ref,       # (1, NPp, Ci)  bf16 pooled g values
                     mask_ref,    # (1, NPp)      f32 additive key mask (0 / -1e30)
                     w_th_ref,    # (C, Ci)       bf16 theta 1x1-conv weight
                     b_th_ref,    # (1, Ci)       f32 theta bias
                     w_w_ref,     # (Ci, C)       bf16 W-proj weight (BN folded)
                     b_w_ref,     # (1, C)        f32 W-proj bias (BN folded)
                     out_ref):    # (1, TQ, C)    f32
    x_q = x_ref[0]                                                      # (TQ, C) f32

    # theta 1x1 conv for this query tile (bf16 MXU, f32 accumulate).
    theta = jnp.dot(x_q.astype(jnp.bfloat16), w_th_ref[...],
                    preferred_element_type=jnp.float32) + b_th_ref[...]  # (TQ, Ci)

    # f = theta . phi^T, contracted on the channel axis (no XLU transpose).
    f = jax.lax.dot_general(theta.astype(jnp.bfloat16), phi_ref[0],
                            dimension_numbers=(((1,), (1,)), ((), ())),
                            preferred_element_type=jnp.float32)          # (TQ, NPp)
    f = f + mask_ref[...]                                                # mask padded keys

    # softmax over keys (f32, EUP reciprocal + one Newton step instead of a divide)
    m = jnp.max(f, axis=-1, keepdims=True)
    e = jnp.exp(f - m)
    s = jnp.sum(e, axis=-1, keepdims=True)
    r = pl.reciprocal(s, approx=True)
    r = r * (2.0 - s * r)
    p = (e * r).astype(jnp.bfloat16)

    y = jnp.dot(p, g_ref[0], preferred_element_type=jnp.float32)         # (TQ, Ci)

    # W projection (BN eval-affine pre-folded) + residual (f32).
    wy = jnp.dot(y.astype(jnp.bfloat16), w_w_ref[...],
                 preferred_element_type=jnp.float32) + b_w_ref[...]       # (TQ, C)
    out_ref[0] = (wy + x_q).astype(out_ref.dtype)


def _pick_tq(n):
    # Largest divisor of n that is a multiple of 8 and <= 512; else full extent
    # (full-dim blocks are exempt from the (8,128) rule).
    for t in range(min(n, 512), 7, -1):
        if n % t == 0 and t % 8 == 0:
            return t
    return n


def _estimate_vmem_bytes(tq, C, Ci, np_pad):
    f32, bf16 = 4, 2
    per_step = (tq * C * f32                      # x tile
                + tq * C * f32                    # out tile
                + 2 * np_pad * Ci * bf16          # phi + g
                + np_pad * f32                    # key mask
                + (C * Ci + Ci * C) * bf16        # weights
                + (Ci + C) * f32)                 # biases
    temps = (3 * tq * np_pad * f32                # f, exp, p
             + 2 * tq * Ci * f32                  # theta, y
             + tq * C * f32)                      # wy
    est = 2 * per_step + temps + (4 << 20)        # double-buffering + headroom
    return int(min(max(est, 32 << 20), 48 << 20))  # stay under v7x's 64 MiB physical


def nonlocal_block_2d(x_nchw, params, *, tq=None):
    """x_nchw: (B, C, H, W) float32.  Returns (B, C, H, W)."""
    B, C, H, W = x_nchw.shape
    Ci = params["w_theta"].shape[1]
    assert H % 2 == 0 and W % 2 == 0, "sub_sample=True requires even H and W"
    N = H * W
    NP = (H // 2) * (W // 2)
    NPp = ((NP + 127) // 128) * 128               # pad key axis to a lane-dense width

    if tq is None:
        tq = _pick_tq(N)
    assert N % tq == 0 and (tq % 8 == 0 or tq == N)

    # Single layout pass: NCHW -> (B, N, C), channels on the lane axis.
    # Kept f32 so the residual path (and the gamma=0 identity) is exact.
    x_flat = jnp.transpose(x_nchw, (0, 2, 3, 1)).reshape(B, N, C)

    # ---- phi / g precompute hoisted to XLA: packed 1x1 conv + 2x2 max-pool ----
    w_pg = jnp.concatenate([params["w_phi"], params["w_g"]], axis=1)          # (C, 2Ci)
    b_pg = jnp.concatenate([params["b_phi"], params["b_g"]])                  # (2Ci,)
    pg = jnp.einsum("bnc,ck->bnk", x_flat, w_pg) + b_pg                       # (B, N, 2Ci)
    pg = pg.reshape(B, H // 2, 2, W // 2, 2, 2 * Ci).max(axis=(2, 4))
    pg = pg.reshape(B, NP, 2 * Ci)
    phi_p, g_p = pg[..., :Ci], pg[..., Ci:]
    if NPp != NP:
        pad = ((0, 0), (0, NPp - NP), (0, 0))
        phi_p = jnp.pad(phi_p, pad)
        g_p = jnp.pad(g_p, pad)
    phi_p = phi_p.astype(jnp.bfloat16)
    g_p = g_p.astype(jnp.bfloat16)
    key_mask = jnp.where(jnp.arange(NPp) < NP, 0.0, -1e30
                         ).astype(jnp.float32).reshape(1, NPp)

    # theta conv weights (bf16 for MXU) and BN-eval-affine folded W projection.
    w_th = params["w_theta"].astype(jnp.bfloat16)                             # (C, Ci)
    b_th = params["b_theta"].reshape(1, Ci).astype(jnp.float32)
    w_wf = (params["w_w"] * params["bn_scale"][None, :]).astype(jnp.bfloat16)  # (Ci, C)
    b_wf = (params["b_w"] * params["bn_scale"]
            + params["bn_shift"]).reshape(1, C).astype(jnp.float32)

    def rep(shape):
        return pl.BlockSpec(shape, lambda b, q: (0,) * len(shape))

    grid_spec = pltpu.PrefetchScalarGridSpec(
        num_scalar_prefetch=0,
        grid=(B, N // tq),
        in_specs=[
            pl.BlockSpec((1, tq, C), lambda b, q: (b, q, 0)),     # x query tile
            pl.BlockSpec((1, NPp, Ci), lambda b, q: (b, 0, 0)),   # pooled phi (per image)
            pl.BlockSpec((1, NPp, Ci), lambda b, q: (b, 0, 0)),   # pooled g   (per image)
            rep((1, NPp)),                                        # key mask
            rep((C, Ci)), rep((1, Ci)),                           # theta conv
            rep((Ci, C)), rep((1, C)),                            # BN-folded W proj
        ],
        out_specs=pl.BlockSpec((1, tq, C), lambda b, q: (b, q, 0)),
    )

    flops = int(2 * B * N * C * Ci            # theta conv
                + 2 * (2 * B * N * NPp * Ci)  # f and y matmuls
                + 2 * B * N * Ci * C)         # W projection
    cost = pl.CostEstimate(
        flops=flops,
        transcendentals=int(B * N * NPp),
        bytes_accessed=int(2 * B * N * C * 4 + 2 * B * NPp * Ci * 2
                           + 2 * C * Ci * 2 + NPp * 4 + (Ci + C) * 4),
    )

    z_flat = pl.pallas_call(
        _nonlocal_kernel,
        out_shape=jax.ShapeDtypeStruct((B, N, C), x_nchw.dtype),
        grid_spec=grid_spec,
        compiler_params=pltpu.CompilerParams(
            dimension_semantics=("parallel", "parallel"),
            vmem_limit_bytes=_estimate_vmem_bytes(tq, C, Ci, NPp)),
        cost_estimate=cost,
    )(x_flat, phi_p, g_p, key_mask, w_th, b_th, w_wf, b_wf)

    return jnp.transpose(z_flat.reshape(B, H, W, C), (0, 3, 1, 2))


def nonlocal_block_2d_ref(x, params):
    """Pure-JAX f32 reference mirroring the PyTorch forward (BN folded to eval affine)."""
    B, C, H, W = x.shape
    Ci = params["w_theta"].shape[1]
    P = jax.lax.Precision.HIGHEST

    def conv1x1(inp, w, b):  # w: (Cin, Cout)
        return jnp.einsum("bchw,ck->bkhw", inp, w, precision=P) + b[None, :, None, None]

    def maxpool2(inp):
        b_, c_, h_, w_ = inp.shape
        return jnp.max(inp.reshape(b_, c_, h_ // 2, 2, w_ // 2, 2), axis=(3, 5))

    g_x = maxpool2(conv1x1(x, params["w_g"], params["b_g"])).reshape(B, Ci, -1)
    g_x = jnp.transpose(g_x, (0, 2, 1))
    theta_x = conv1x1(x, params["w_theta"], params["b_theta"]).reshape(B, Ci, -1)
    theta_x = jnp.transpose(theta_x, (0, 2, 1))
    phi_x = maxpool2(conv1x1(x, params["w_phi"], params["b_phi"])).reshape(B, Ci, -1)

    f = jnp.einsum("bnc,bcm->bnm", theta_x, phi_x, precision=P)
    f_div_c = jax.nn.softmax(f, axis=-1)
    y = jnp.einsum("bnm,bmc->bnc", f_div_c, g_x, precision=P)
    y = jnp.transpose(y, (0, 2, 1)).reshape(B, Ci, H, W)

    w_y = conv1x1(y, params["w_w"], params["b_w"])
    w_y = (w_y * params["bn_scale"][None, :, None, None]
           + params["bn_shift"][None, :, None, None])
    return w_y + x


def make_params(key, in_channels, inter_channels, bn_gamma, bn_beta):
    ks = jax.random.split(key, 8)
    C, Ci = in_channels, inter_channels
    eps = 1e-5
    running_mean = jnp.zeros((C,), jnp.float32)
    running_var = jnp.ones((C,), jnp.float32)
    scale = bn_gamma / jnp.sqrt(running_var + eps)
    shift = bn_beta - running_mean * scale
    return {
        # 1x1 conv weights stored as (Cin, Cout)  (== PyTorch W[:, :, 0, 0].T)
        "w_g":     0.05 * jax.random.normal(ks[0], (C, Ci), jnp.float32),
        "b_g":     0.05 * jax.random.normal(ks[1], (Ci,), jnp.float32),
        "w_theta": 0.05 * jax.random.normal(ks[2], (C, Ci), jnp.float32),
        "b_theta": 0.05 * jax.random.normal(ks[3], (Ci,), jnp.float32),
        "w_phi":   0.05 * jax.random.normal(ks[4], (C, Ci), jnp.float32),
        "b_phi":   0.05 * jax.random.normal(ks[5], (Ci,), jnp.float32),
        "w_w":     0.05 * jax.random.normal(ks[6], (Ci, C), jnp.float32),
        "b_w":     0.05 * jax.random.normal(ks[7], (C,), jnp.float32),
        "bn_scale": scale,
        "bn_shift": shift,
    }


if __name__ == "__main__":
    B, C, H, W = 2, 128, 16, 16
    Ci = C // 2 if C // 2 > 0 else 1          # inter_channels = in_channels // 2

    key = jax.random.PRNGKey(0)
    kx, kp, kg, kb = jax.random.split(key, 4)
    x = jax.random.normal(kx, (B, C, H, W), jnp.float32)

    fwd = jax.jit(nonlocal_block_2d)

    # 1) Faithful to NonLocalBlock2D.__init__: BN gamma=0, beta=0  ->  z == x.
    params_init = make_params(kp, C, Ci,
                              bn_gamma=jnp.zeros((C,), jnp.float32),
                              bn_beta=jnp.zeros((C,), jnp.float32))
    z = jax.block_until_ready(fwd(x, params_init))
    z_ref = nonlocal_block_2d_ref(x, params_init)
    assert z.shape == (B, C, H, W)
    assert jnp.allclose(z, x, rtol=1e-5, atol=1e-5)       # gamma=0 => residual only
    assert jnp.allclose(z, z_ref, rtol=1e-4, atol=1e-4)

    # 2) Non-degenerate BN affine (test-only override) to exercise the full
    #    attention path against the pure-JAX f32 reference (bf16-MXU tolerance).
    params_test = make_params(kp, C, Ci,
                              bn_gamma=1.0 + 0.1 * jax.random.normal(kg, (C,), jnp.float32),
                              bn_beta=0.1 * jax.random.normal(kb, (C,), jnp.float32))
    z2 = jax.block_until_ready(fwd(x, params_test))
    z2_ref = nonlocal_block_2d_ref(x, params_test)
    assert jnp.allclose(z2, z2_ref, rtol=3e-2, atol=3e-2), \
        float(jnp.max(jnp.abs(z2 - z2_ref)))

    print("KERNEL_OK")
</pallas_src>

<mosaic_0001>
module attributes {stable_mosaic.version = 11 : i64} {
  func.func @_nonlocal_kernel(%arg0: i32, %arg1: i32, %arg2: memref<1x256x128xf32, #tpu.memory_space<vmem>>, %arg3: memref<1x128x64xbf16, #tpu.memory_space<vmem>>, %arg4: memref<1x128x64xbf16, #tpu.memory_space<vmem>>, %arg5: memref<1x128xf32, #tpu.memory_space<vmem>>, %arg6: memref<128x64xbf16, #tpu.memory_space<vmem>>, %arg7: memref<1x64xf32, #tpu.memory_space<vmem>>, %arg8: memref<64x128xbf16, #tpu.memory_space<vmem>>, %arg9: memref<1x128xf32, #tpu.memory_space<vmem>>, %arg10: memref<1x256x128xf32, #tpu.memory_space<vmem>>) attributes {dimension_semantics = [#tpu.dimension_semantics<parallel>, #tpu.dimension_semantics<parallel>], iteration_bounds = array<i64: 2, 1>, scalar_prefetch = 0 : i64, scratch_operands = 0 : i64, tpu.core_type = #tpu.core_type<tc>, window_params = [{transform_indices = @transform_0, window_bounds = array<i64: 1, 256, 128>}, {transform_indices = @transform_1, window_bounds = array<i64: 1, 128, 64>}, {transform_indices = @transform_2, window_bounds = array<i64: 1, 128, 64>}, {pipeline_mode = #tpu.pipeline_mode<synchronous>, transform_indices = @transform_3, window_bounds = array<i64: 1, 128>}, {pipeline_mode = #tpu.pipeline_mode<synchronous>, transform_indices = @transform_4, window_bounds = array<i64: 128, 64>}, {pipeline_mode = #tpu.pipeline_mode<synchronous>, transform_indices = @transform_5, window_bounds = array<i64: 1, 64>}, {pipeline_mode = #tpu.pipeline_mode<synchronous>, transform_indices = @transform_6, window_bounds = array<i64: 64, 128>}, {pipeline_mode = #tpu.pipeline_mode<synchronous>, transform_indices = @transform_7, window_bounds = array<i64: 1, 128>}, {transform_indices = @transform_8, window_bounds = array<i64: 1, 256, 128>}]} {
    %c0 = arith.constant 0 : index
    %c0_0 = arith.constant 0 : index
    %c0_1 = arith.constant 0 : index
    %0 = vector.load %arg2[%c0, %c0_0, %c0_1] : memref<1x256x128xf32, #tpu.memory_space<vmem>>, vector<1x256x128xf32>
    %1 = vector.shape_cast %0 : vector<1x256x128xf32> to vector<256x128xf32>
    %2 = arith.truncf %1 : vector<256x128xf32> to vector<256x128xbf16>
    %c0_2 = arith.constant 0 : index
    %c0_3 = arith.constant 0 : index
    %3 = vector.load %arg6[%c0_2, %c0_3] : memref<128x64xbf16, #tpu.memory_space<vmem>>, vector<128x64xbf16>
    %cst = arith.constant dense<0.000000e+00> : vector<256x64xf32>
    %4 = tpu.matmul %2, %3, %cst {dimension_numbers = #tpu.dot_dimension_numbers<[1], [0], [0], [1], [0, 0, 1, 1], [], []>} : vector<256x128xbf16>, vector<128x64xbf16>, vector<256x64xf32> -> vector<256x64xf32>
    %c0_4 = arith.constant 0 : index
    %c0_5 = arith.constant 0 : index
    %5 = vector.load %arg7[%c0_4, %c0_5] : memref<1x64xf32, #tpu.memory_space<vmem>>, vector<1x64xf32>
    %6 = vector.broadcast %5 : vector<1x64xf32> to vector<256x64xf32>
    %7 = arith.addf %4, %6 : vector<256x64xf32>
    %8 = arith.truncf %7 : vector<256x64xf32> to vector<256x64xbf16>
    %c0_6 = arith.constant 0 : index
    %c0_7 = arith.constant 0 : index
    %c0_8 = arith.constant 0 : index
    %9 = vector.load %arg3[%c0_6, %c0_7, %c0_8] : memref<1x128x64xbf16, #tpu.memory_space<vmem>>, vector<1x128x64xbf16>
    %10 = vector.shape_cast %9 : vector<1x128x64xbf16> to vector<128x64xbf16>
    %cst_9 = arith.constant dense<0.000000e+00> : vector<256x128xf32>
    %11 = tpu.matmul %8, %10, %cst_9 {dimension_numbers = #tpu.dot_dimension_numbers<[1], [1], [0], [0], [0, 0, 1, 0], [], []>} : vector<256x64xbf16>, vector<128x64xbf16>, vector<256x128xf32> -> vector<256x128xf32>
    %c0_10 = arith.constant 0 : index
    %c0_11 = arith.constant 0 : index
    %12 = vector.load %arg5[%c0_10, %c0_11] : memref<1x128xf32, #tpu.memory_space<vmem>>, vector<1x128xf32>
    %13 = vector.broadcast %12 : vector<1x128xf32> to vector<256x128xf32>
    %14 = arith.addf %11, %13 : vector<256x128xf32>
    %cst_12 = arith.constant dense<0xFF800000> : vector<256xf32>
    %15 = vector.multi_reduction <maximumf>, %14, %cst_12 [1] : vector<256x128xf32> to vector<256xf32>
    %16 = vector.shape_cast %15 : vector<256xf32> to vector<256x1xf32>
    %17 = vector.broadcast %16 : vector<256x1xf32> to vector<256x128xf32>
    %18 = arith.subf %14, %17 : vector<256x128xf32>
    %19 = math.exp %18 : vector<256x128xf32>
    %cst_13 = arith.constant dense<0.000000e+00> : vector<256xf32>
    %20 = vector.multi_reduction <add>, %19, %cst_13 [1] : vector<256x128xf32> to vector<256xf32>
    %21 = vector.shape_cast %20 : vector<256xf32> to vector<256x1xf32>
    %22 = tpu.reciprocal %21 {approx = true} : vector<256x1xf32> -> vector<256x1xf32>
    %23 = arith.mulf %21, %22 : vector<256x1xf32>
    %cst_14 = arith.constant 2.000000e+00 : f32
    %24 = vector.broadcast %cst_14 : f32 to vector<256x1xf32>
    %25 = arith.subf %24, %23 : vector<256x1xf32>
    %26 = arith.mulf %22, %25 : vector<256x1xf32>
    %27 = vector.broadcast %26 : vector<256x1xf32> to vector<256x128xf32>
    %28 = arith.mulf %19, %27 : vector<256x128xf32>
    %29 = arith.truncf %28 : vector<256x128xf32> to vector<256x128xbf16>
    %c0_15 = arith.constant 0 : index
    %c0_16 = arith.constant 0 : index
    %c0_17 = arith.constant 0 : index
    %30 = vector.load %arg4[%c0_15, %c0_16, %c0_17] : memref<1x128x64xbf16, #tpu.memory_space<vmem>>, vector<1x128x64xbf16>
    %31 = vector.shape_cast %30 : vector<1x128x64xbf16> to vector<128x64xbf16>
    %cst_18 = arith.constant dense<0.000000e+00> : vector<256x64xf32>
    %32 = tpu.matmul %29, %31, %cst_18 {dimension_numbers = #tpu.dot_dimension_numbers<[1], [0], [0], [1], [0, 0, 1, 1], [], []>} : vector<256x128xbf16>, vector<128x64xbf16>, vector<256x64xf32> -> vector<256x64xf32>
    %33 = arith.truncf %32 : vector<256x64xf32> to vector<256x64xbf16>
    %c0_19 = arith.constant 0 : index
    %c0_20 = arith.constant 0 : index
    %34 = vector.load %arg8[%c0_19, %c0_20] : memref<64x128xbf16, #tpu.memory_space<vmem>>, vector<64x128xbf16>
    %cst_21 = arith.constant dense<0.000000e+00> : vector<256x128xf32>
    %35 = tpu.matmul %33, %34, %cst_21 {dimension_numbers = #tpu.dot_dimension_numbers<[1], [0], [0], [1], [0, 0, 1, 1], [], []>} : vector<256x64xbf16>, vector<64x128xbf16>, vector<256x128xf32> -> vector<256x128xf32>
    %c0_22 = arith.constant 0 : index
    %c0_23 = arith.constant 0 : index
    %36 = vector.load %arg9[%c0_22, %c0_23] : memref<1x128xf32, #tpu.memory_space<vmem>>, vector<1x128xf32>
    %37 = vector.broadcast %36 : vector<1x128xf32> to vector<256x128xf32>
    %38 = arith.addf %35, %37 : vector<256x128xf32>
    %39 = arith.addf %38, %1 : vector<256x128xf32>
    %c0_24 = arith.constant 0 : index
    %c0_25 = arith.constant 0 : index
    %c0_26 = arith.constant 0 : index
    %40 = vector.load %arg10[%c0_24, %c0_25, %c0_26] : memref<1x256x128xf32, #tpu.memory_space<vmem>>, vector<1x256x128xf32>
    %41 = vector.shape_cast %40 : vector<1x256x128xf32> to vector<256x128xf32>
    %42 = vector.shape_cast %39 : vector<256x128xf32> to vector<1x256x128xf32>
    tpu.vector_store %arg10[%c0_24, %c0_25, %c0_26], %42 {strides = array<i32>} : memref<1x256x128xf32, #tpu.memory_space<vmem>>, vector<1x256x128xf32>,
    return
  }
  func.func @transform_0(%arg0: i32, %arg1: i32) -> (i32, i32, i32) {
    %c0_i32 = arith.constant 0 : i32
    %c0_i32_0 = arith.constant 0 : i32
    return %arg0, %arg1, %c0_i32 : i32, i32, i32
  }
  func.func @transform_1(%arg0: i32, %arg1: i32) -> (i32, i32, i32) {
    %c0_i32 = arith.constant 0 : i32
    %c0_i32_0 = arith.constant 0 : i32
    %c0_i32_1 = arith.constant 0 : i32
    return %arg0, %c0_i32, %c0_i32_0 : i32, i32, i32
  }
  func.func @transform_2(%arg0: i32, %arg1: i32) -> (i32, i32, i32) {
    %c0_i32 = arith.constant 0 : i32
    %c0_i32_0 = arith.constant 0 : i32
    %c0_i32_1 = arith.constant 0 : i32
    return %arg0, %c0_i32, %c0_i32_0 : i32, i32, i32
  }
  func.func @transform_3(%arg0: i32, %arg1: i32) -> (i32, i32) {
    %c0_i32 = arith.constant 0 : i32
    %c0_i32_0 = arith.constant 0 : i32
    %c0_i32_1 = arith.constant 0 : i32
    return %c0_i32, %c0_i32_0 : i32, i32
  }
  func.func @transform_4(%arg0: i32, %arg1: i32) -> (i32, i32) {
    %c0_i32 = arith.constant 0 : i32
    %c0_i32_0 = arith.constant 0 : i32
    %c0_i32_1 = arith.constant 0 : i32
    return %c0_i32, %c0_i32_0 : i32, i32
  }
  func.func @transform_5(%arg0: i32, %arg1: i32) -> (i32, i32) {
    %c0_i32 = arith.constant 0 : i32
    %c0_i32_0 = arith.constant 0 : i32
    %c0_i32_1 = arith.constant 0 : i32
    return %c0_i32, %c0_i32_0 : i32, i32
  }
  func.func @transform_6(%arg0: i32, %arg1: i32) -> (i32, i32) {
    %c0_i32 = arith.constant 0 : i32
    %c0_i32_0 = arith.constant 0 : i32
    %c0_i32_1 = arith.constant 0 : i32
    return %c0_i32, %c0_i32_0 : i32, i32
  }
  func.func @transform_7(%arg0: i32, %arg1: i32) -> (i32, i32) {
    %c0_i32 = arith.constant 0 : i32
    %c0_i32_0 = arith.constant 0 : i32
    %c0_i32_1 = arith.constant 0 : i32
    return %c0_i32, %c0_i32_0 : i32, i32
  }
  func.func @transform_8(%arg0: i32, %arg1: i32) -> (i32, i32, i32) {
    %c0_i32 = arith.constant 0 : i32
    %c0_i32_0 = arith.constant 0 : i32
    return %arg0, %arg1, %c0_i32 : i32, i32, i32
  }
}

</mosaic_0001>

<llo_original>
// kernel: nonlocal_block_2d.1
$region0: #{nonlocal_block_2d.1}
  #allocation0 [shape = 'u32[]', space=smem, size = 0x4, offset = 0x4, fixed_abs, tag = 'smem constant byte address 0x4 - core index']
  #allocation1 [shape = 'u32[144,128]{1,0:T(1,128)}', space=vmem, size = 0x12000, scoped, tag = 'internal scratch']
  %s0 = inlined_call_operand.vmem [shape: f32[2,256,128], index: 0, kind: input, shape index: {}]
  %s1 = inlined_call_operand.vmem [shape: bf16[2,128,64], index: 1, kind: input, shape index: {}]
  %s2 = inlined_call_operand.vmem [shape: bf16[2,128,64], index: 2, kind: input, shape index: {}]
  %s3 = inlined_call_operand.vmem [shape: f32[1,128], index: 3, kind: input, shape index: {}]
  %s4 = inlined_call_operand.vmem [shape: bf16[128,64], index: 4, kind: input, shape index: {}]
  %s5 = inlined_call_operand.vmem [shape: f32[1,64], index: 5, kind: input, shape index: {}]
  %s6 = inlined_call_operand.vmem [shape: bf16[64,128], index: 6, kind: input, shape index: {}]
  %s7 = inlined_call_operand.vmem [shape: f32[1,128], index: 7, kind: input, shape index: {}]
  %s8 = inlined_call_operand.hbm [shape: f32[2,256,128], index: 8, kind: output, shape index: {}]
  %s9 = sld [smem:[#allocation0]]
  $region65: #{nonlocal_block_2d.1} parent=0
    _
  %s11 = ssub.s32 1, %s9
  %s12 = scalar_select 0, %s11, %s9
  $region1: #{nonlocal_block_2d.1} parent=0
    #allocation2 [shape = 'u8[262144]{0}', space=vmem, size = 0x40000, scoped, tag = 'output window, operand 0']
    #allocation3 [shape = 's32[2]{0}', space=sflag, size = 0x8, scoped, tag = 'scoped memory for nonlocal_block_2d.1']
    %13 = vsyncpa [#allocation3], 0
    %s14 = scalar_lea.sflag [#allocation3], 1
    %15 = vsyncpa %s14, 0
    loop: start=0, step=1, limit=4
    $region2: #{nonlocal_block_2d.1} parent=1 // loop_pre_header
      _
    $region3: #{nonlocal_block_2d.1} parent=1 // loop_header
      %s17 = sphi 0, %s21
      %p18 = scmp.ge.s32.totalorder %s17, 4
      %s24 = sphi 0, %s36
      %s25 = sphi 0, %s32
      %s26 = sphi 0, %s24
      %s27 = sphi 0, %s25
      %s28 = sphi 0, %s26
      %s29 = sphi 0, %s27
      %s41 = sphi 0, %s43
      %s44 = sphi 0, %s41
      %s45 = sphi 0, %s44
      %s61 = sphi 0, %s45
      %s67 = sphi 0, %s69
      %s70 = sphi 0, %s67
      %s71 = sphi 0, %s70
      %s87 = sphi 0, %s71
      %s93 = sphi 0, %s95
      %s96 = sphi 0, %s93
      %s97 = sphi 0, %s96
      %s113 = sphi 0, %s97
      %s117 = sphi 0, %s117
      %s119 = sphi 0, %s117
      %s120 = sphi 0, %s119
      %s134 = sphi 0, %s120
      %s138 = sphi 0, %s138
      %s140 = sphi 0, %s138
      %s141 = sphi 0, %s140
      %s155 = sphi 0, %s141
      %s159 = sphi 0, %s159
      %s161 = sphi 0, %s159
      %s162 = sphi 0, %s161
      %s176 = sphi 0, %s162
      %s180 = sphi 0, %s180
      %s182 = sphi 0, %s180
      %s183 = sphi 0, %s182
      %s197 = sphi 0, %s183
      %s201 = sphi 0, %s201
      %s203 = sphi 0, %s201
      %s204 = sphi 0, %s203
      %s218 = sphi 0, %s204
      %s226 = sphi 0, %s228
      %s229 = sphi 0, %s226
      %s230 = sphi 0, %s229
      %s246 = sphi 0, %s230
    $region4: #{nonlocal_block_2d.1} parent=1 // loop_header_branch
      %20 = sbr.rel (%p18) target = $region8
    $region5: #{nonlocal_block_2d.1} parent=1 // loop_body
      %s22 = ssub.s32 %s17, 1
      %s23 = ssub.s32 %s17, 2
      %s30 = sadd.s32 1, %s25
      %p31 = scmp.ge.s32.totalorder %s30, 1
      %s32 = scalar_select %p31, 0, %s30
      %s33 = sadd.s32 1, %s24
      %s34 = scalar_select %p31, %s33, %s24
      %p35 = scmp.ge.s32.totalorder %s34, 2
      %s36 = scalar_select %p35, 0, %s34
      %s37 = ssub.s32 %s24, %s36
      %s38 = ssub.s32 %s25, %s32
      %s39 = sor.u32 %s37, %s38
      %p40 = scmp.eq.s32.totalorder %s39, 0
      %s42 = sadd.s32 %s41, 1
      %s43 = scalar_select %p40, %s41, %s42
      %p46 = pneg %p40
      %p47 = scmp.eq.s32.totalorder %s17, 1
      %p48 = por %p46, %p47
      %p49 = scmp.ne.s32.totalorder %s41, %s44
      %p50 = scmp.eq.s32.totalorder %s17, 0
      %p51 = por %p49, %p50
      %p52 = scmp.ne.s32.totalorder %s41, %s44
      %p53 = scmp.eq.s32.totalorder %s22, 1
      %p54 = por %p52, %p53
      %p55 = scmp.ne.s32.totalorder %s44, %s45
      %p56 = scmp.eq.s32.totalorder %s22, 0
      %p57 = por %p55, %p56
      %p58 = scmp.ne.s32.totalorder %s44, %s45
      %p59 = scmp.eq.s32.totalorder %s23, 1
      %p60 = por %p58, %p59
      %p62 = scmp.ne.s32.totalorder %s45, %s61
      %p63 = scmp.eq.s32.totalorder %s23, 0
      %p64 = por %p62, %p63
      %s65 = ssub.s32 %s24, %s36
      %p66 = scmp.eq.s32.totalorder %s65, 0
      %s68 = sadd.s32 %s67, 1
      %s69 = scalar_select %p66, %s67, %s68
      %p72 = pneg %p66
      %p73 = scmp.eq.s32.totalorder %s17, 1
      %p74 = por %p72, %p73
      %p75 = scmp.ne.s32.totalorder %s67, %s70
      %p76 = scmp.eq.s32.totalorder %s17, 0
      %p77 = por %p75, %p76
      %p78 = scmp.ne.s32.totalorder %s67, %s70
      %p79 = scmp.eq.s32.totalorder %s22, 1
      %p80 = por %p78, %p79
      %p81 = scmp.ne.s32.totalorder %s70, %s71
      %p82 = scmp.eq.s32.totalorder %s22, 0
      %p83 = por %p81, %p82
      %p84 = scmp.ne.s32.totalorder %s70, %s71
      %p85 = scmp.eq.s32.totalorder %s23, 1
      %p86 = por %p84, %p85
      %p88 = scmp.ne.s32.totalorder %s71, %s87
      %p89 = scmp.eq.s32.totalorder %s23, 0
      %p90 = por %p88, %p89
      %s91 = ssub.s32 %s24, %s36
      %p92 = scmp.eq.s32.totalorder %s91, 0
      %s94 = sadd.s32 %s93, 1
      %s95 = scalar_select %p92, %s93, %s94
      %p98 = pneg %p92
      %p99 = scmp.eq.s32.totalorder %s17, 1
      %p100 = por %p98, %p99
      %p101 = scmp.ne.s32.totalorder %s93, %s96
      %p102 = scmp.eq.s32.totalorder %s17, 0
      %p103 = por %p101, %p102
      %p104 = scmp.ne.s32.totalorder %s93, %s96
      %p105 = scmp.eq.s32.totalorder %s22, 1
      %p106 = por %p104, %p105
      %p107 = scmp.ne.s32.totalorder %s96, %s97
      %p108 = scmp.eq.s32.totalorder %s22, 0
      %p109 = por %p107, %p108
      %p110 = scmp.ne.s32.totalorder %s96, %s97
      %p111 = scmp.eq.s32.totalorder %s23, 1
      %p112 = por %p110, %p111
      %p114 = scmp.ne.s32.totalorder %s97, %s113
      %p115 = scmp.eq.s32.totalorder %s23, 0
      %p116 = por %p114, %p115
      %s118 = sadd.s32 %s117, 1
      %p121 = scmp.eq.s32.totalorder %s17, 1
      %p122 = scmp.ne.s32.totalorder %s117, %s119
      %p123 = scmp.eq.s32.totalorder %s17, 0
      %p124 = por %p122, %p123
      %p125 = scmp.ne.s32.totalorder %s117, %s119
      %p126 = scmp.eq.s32.totalorder %s22, 1
      %p127 = por %p125, %p126
      %p128 = scmp.ne.s32.totalorder %s119, %s120
      %p129 = scmp.eq.s32.totalorder %s22, 0
      %p130 = por %p128, %p129
      %p131 = scmp.ne.s32.totalorder %s119, %s120
      %p132 = scmp.eq.s32.totalorder %s23, 1
      %p133 = por %p131, %p132
      %p135 = scmp.ne.s32.totalorder %s120, %s134
      %p136 = scmp.eq.s32.totalorder %s23, 0
      %p137 = por %p135, %p136
      %s139 = sadd.s32 %s138, 1
      %p142 = scmp.eq.s32.totalorder %s17, 1
      %p143 = scmp.ne.s32.totalorder %s138, %s140
      %p144 = scmp.eq.s32.totalorder %s17, 0
      %p145 = por %p143, %p144
      %p146 = scmp.ne.s32.totalorder %s138, %s140
      %p147 = scmp.eq.s32.totalorder %s22, 1
      %p148 = por %p146, %p147
      %p149 = scmp.ne.s32.totalorder %s140, %s141
      %p150 = scmp.eq.s32.totalorder %s22, 0
      %p151 = por %p149, %p150
      %p152 = scmp.ne.s32.totalorder %s140, %s141
      %p153 = scmp.eq.s32.totalorder %s23, 1
      %p154 = por %p152, %p153
      %p156 = scmp.ne.s32.totalorder %s141, %s155
      %p157 = scmp.eq.s32.totalorder %s23, 0
      %p158 = por %p156, %p157
      %s160 = sadd.s32 %s159, 1
      %p163 = scmp.eq.s32.totalorder %s17, 1
      %p164 = scmp.ne.s32.totalorder %s159, %s161
      %p165 = scmp.eq.s32.totalorder %s17, 0
      %p166 = por %p164, %p165
      %p167 = scmp.ne.s32.totalorder %s159, %s161
      %p168 = scmp.eq.s32.totalorder %s22, 1
      %p169 = por %p167, %p168
      %p170 = scmp.ne.s32.totalorder %s161, %s162
      %p171 = scmp.eq.s32.totalorder %s22, 0
      %p172 = por %p170, %p171
      %p173 = scmp.ne.s32.totalorder %s161, %s162
      %p174 = scmp.eq.s32.totalorder %s23, 1
      %p175 = por %p173, %p174
      %p177 = scmp.ne.s32.totalorder %s162, %s176
      %p178 = scmp.eq.s32.totalorder %s23, 0
      %p179 = por %p177, %p178
      %s181 = sadd.s32 %s180, 1
      %p184 = scmp.eq.s32.totalorder %s17, 1
      %p185 = scmp.ne.s32.totalorder %s180, %s182
      %p186 = scmp.eq.s32.totalorder %s17, 0
      %p187 = por %p185, %p186
      %p188 = scmp.ne.s32.totalorder %s180, %s182
      %p189 = scmp.eq.s32.totalorder %s22, 1
      %p190 = por %p188, %p189
      %p191 = scmp.ne.s32.totalorder %s182, %s183
      %p192 = scmp.eq.s32.totalorder %s22, 0
      %p193 = por %p191, %p192
      %p194 = scmp.ne.s32.totalorder %s182, %s183
      %p195 = scmp.eq.s32.totalorder %s23, 1
      %p196 = por %p194, %p195
      %p198 = scmp.ne.s32.totalorder %s183, %s197
      %p199 = scmp.eq.s32.totalorder %s23, 0
      %p200 = por %p198, %p199
      %s202 = sadd.s32 %s201, 1
      %p205 = scmp.eq.s32.totalorder %s17, 1
      %p206 = scmp.ne.s32.totalorder %s201, %s203
      %p207 = scmp.eq.s32.totalorder %s17, 0
      %p208 = por %p206, %p207
      %p209 = scmp.ne.s32.totalorder %s201, %s203
      %p210 = scmp.eq.s32.totalorder %s22, 1
      %p211 = por %p209, %p210
      %p212 = scmp.ne.s32.totalorder %s203, %s204
      %p213 = scmp.eq.s32.totalorder %s22, 0
      %p214 = por %p212, %p213
      %p215 = scmp.ne.s32.totalorder %s203, %s204
      %p216 = scmp.eq.s32.totalorder %s23, 1
      %p217 = por %p215, %p216
      %p219 = scmp.ne.s32.totalorder %s204, %s218
      %p220 = scmp.eq.s32.totalorder %s23, 0
      %p221 = por %p219, %p220
      %s222 = ssub.s32 %s24, %s36
      %s223 = ssub.s32 %s25, %s32
      %s224 = sor.u32 %s222, %s223
      %p225 = scmp.eq.s32.totalorder %s224, 0
      %s227 = sadd.s32 %s226, 1
      %s228 = scalar_select %p225, %s226, %s227
      %p231 = pneg %p225
      %p232 = scmp.eq.s32.totalorder %s17, 1
      %p233 = por %p231, %p232
      %p234 = scmp.ne.s32.totalorder %s226, %s229
      %p235 = scmp.eq.s32.totalorder %s17, 0
      %p236 = por %p234, %p235
      %p237 = scmp.ne.s32.totalorder %s226, %s229
      %p238 = scmp.eq.s32.totalorder %s22, 1
      %p239 = por %p237, %p238
      %p240 = scmp.ne.s32.totalorder %s229, %s230
      %p241 = scmp.eq.s32.totalorder %s22, 0
      %p242 = por %p240, %p241
      %p243 = scmp.ne.s32.totalorder %s229, %s230
      %p244 = scmp.eq.s32.totalorder %s23, 1
      %p245 = por %p243, %p244
      %p247 = scmp.ne.s32.totalorder %s230, %s246
      %p248 = scmp.eq.s32.totalorder %s23, 0
      %p249 = por %p247, %p248
      %p250 = scmp.le.s32.totalorder 1, %s17
      %p251 = scmp.lt.s32.totalorder %s17, 3
      %p252 = pnand %p250, %p251
      %p253 = pneg %p252
      // Predicated region
      $region9: #{nonlocal_block_2d.1} parent=5 // pred_check
        _
      $region10: #{nonlocal_block_2d.1} parent=5 // pred_check_branch
        %255 = sbr.rel (%p252) target = $region12
      $region11: #{nonlocal_block_2d.1} parent=5 // pred_region
        %s256 = ssub.s32 %s17, 1
        // Predicated region
        $region13: #{nonlocal_block_2d.1} parent=11 // pred_check
          %p257 = pneg %p130
        $region14: #{nonlocal_block_2d.1} parent=11 // pred_check_branch
          %259 = sbr.rel (%p257) target = $region16
        $region15: #{nonlocal_block_2d.1} parent=11 // pred_region
          _
        $region16: #{nonlocal_block_2d.1} parent=11 // pred_fallthru
          _
        // Predicated region
        $region17: #{nonlocal_block_2d.1} parent=11 // pred_check
          %p260 = pneg %p151
        $region18: #{nonlocal_block_2d.1} parent=11 // pred_check_branch
          %262 = sbr.rel (%p260) target = $region20
        $region19: #{nonlocal_block_2d.1} parent=11 // pred_region
          _
        $region20: #{nonlocal_block_2d.1} parent=11 // pred_fallthru
          _
        // Predicated region
        $region21: #{nonlocal_block_2d.1} parent=11 // pred_check
          %p263 = pneg %p172
        $region22: #{nonlocal_block_2d.1} parent=11 // pred_check_branch
          %265 = sbr.rel (%p263) target = $region24
        $region23: #{nonlocal_block_2d.1} parent=11 // pred_region
          _
        $region24: #{nonlocal_block_2d.1} parent=11 // pred_fallthru
          _
        // Predicated region
        $region25: #{nonlocal_block_2d.1} parent=11 // pred_check
          %p266 = pneg %p193
        $region26: #{nonlocal_block_2d.1} parent=11 // pred_check_branch
          %268 = sbr.rel (%p266) target = $region28
        $region27: #{nonlocal_block_2d.1} parent=11 // pred_region
          _
        $region28: #{nonlocal_block_2d.1} parent=11 // pred_fallthru
          _
        // Predicated region
        $region29: #{nonlocal_block_2d.1} parent=11 // pred_check
          %p269 = pneg %p214
        $region30: #{nonlocal_block_2d.1} parent=11 // pred_check_branch
          %271 = sbr.rel (%p269) target = $region32
        $region31: #{nonlocal_block_2d.1} parent=11 // pred_region
          _
        $region32: #{nonlocal_block_2d.1} parent=11 // pred_fallthru
          _
      $region12: #{nonlocal_block_2d.1} parent=5 // pred_fallthru
        _
      %p272 = scmp.lt.s32.totalorder %s17, 2
      // Predicated region
      $region33: #{nonlocal_block_2d.1} parent=5 // pred_check
        %p273 = pneg %p272
      $region34: #{nonlocal_block_2d.1} parent=5 // pred_check_branch
        %275 = sbr.rel (%p273) target = $region36
      $region35: #{nonlocal_block_2d.1} parent=5 // pred_region
        // Predicated region
        $region37: #{nonlocal_block_2d.1} parent=35 // pred_check
          %p276 = pneg %p51
        $region38: #{nonlocal_block_2d.1} parent=35 // pred_check_branch
          %278 = sbr.rel (%p276) target = $region40
        $region39: #{nonlocal_block_2d.1} parent=35 // pred_region
          %s279 = smul.u32 32, %s25
          %p280 = scmp.lt.s32.totalorder %s24, 1
          %s281 = scalar_select %p280, %s24, 1
          %p282 = scmp.lt.s32.totalorder %s279, 31
          %s283 = scalar_select %p282, %s279, 31
          %s284 = smul.addr %s281, 32
          %s285 = sadd.s32 %s283, %s284
          %s286 = smul.addr %s285, 8
          %s287 = scalar_lea.vmem %s0, %s286
          %s288 = smul.u32 32, %s25
        $region40: #{nonlocal_block_2d.1} parent=35 // pred_fallthru
          _
        // Predicated region
        $region41: #{nonlocal_block_2d.1} parent=35 // pred_check
          %p289 = pneg %p77
        $region42: #{nonlocal_block_2d.1} parent=35 // pred_check_branch
          %291 = sbr.rel (%p289) target = $region44
        $region43: #{nonlocal_block_2d.1} parent=35 // pred_region
          %p292 = scmp.lt.s32.totalorder %s24, 1
          %s293 = scalar_select %p292, %s24, 1
          %s294 = smul.addr %s293, 16
          %s295 = smul.addr %s294, 4
          %s296 = scalar_lea.vmem %s1, %s295
        $region44: #{nonlocal_block_2d.1} parent=35 // pred_fallthru
          _
        // Predicated region
        $region45: #{nonlocal_block_2d.1} parent=35 // pred_check
          %p297 = pneg %p103
        $region46: #{nonlocal_block_2d.1} parent=35 // pred_check_branch
          %299 = sbr.rel (%p297) target = $region48
        $region47: #{nonlocal_block_2d.1} parent=35 // pred_region
          %p300 = scmp.lt.s32.totalorder %s24, 1
          %s301 = scalar_select %p300, %s24, 1
          %s302 = smul.addr %s301, 16
          %s303 = smul.addr %s302, 4
          %s304 = scalar_lea.vmem %s2, %s303
        $region48: #{nonlocal_block_2d.1} parent=35 // pred_fallthru
          _
      $region36: #{nonlocal_block_2d.1} parent=5 // pred_fallthru
        _
      %p305 = scmp.le.s32.totalorder 1, %s17
      %p306 = scmp.lt.s32.totalorder %s17, 3
      %p307 = pnand %p305, %p306
      %p308 = pneg %p307
      // Predicated region
      $region49: #{nonlocal_block_2d.1} parent=5 // pred_check
        _
      $region50: #{nonlocal_block_2d.1} parent=5 // pred_check_branch
        %310 = sbr.rel (%p307) target = $region52
      $region51: #{nonlocal_block_2d.1} parent=5 // pred_region
        %s311 = ssub.s32 %s17, 1
        %s312 = smul.u32 32, %s27
        %p313 = scmp.lt.s32.totalorder %s26, 1
        %s314 = scalar_select %p313, %s26, 1
        %p315 = scmp.lt.s32.totalorder %s312, 31
        %s316 = scalar_select %p315, %s312, 31
        %s317 = smul.addr %s314, 32
        %s318 = sadd.s32 %s316, %s317
        %s319 = smul.addr %s318, 8
        %s320 = scalar_lea.vmem %s0, %s319
        %p321 = pneg %p57
        %p322 = pneg %p54
        %p323 = scmp.lt.s32.totalorder %s26, 1
        %s324 = scalar_select %p323, %s26, 1
        %s325 = smul.addr %s324, 16
        %s326 = smul.addr %s325, 4
        %s327 = scalar_lea.vmem %s1, %s326
        %p328 = pneg %p83
        %p329 = pneg %p80
        %p330 = scmp.lt.s32.totalorder %s26, 1
        %s331 = scalar_select %p330, %s26, 1
        %s332 = smul.addr %s331, 16
        %s333 = smul.addr %s332, 4
        %s334 = scalar_lea.vmem %s2, %s333
        %p335 = pneg %p109
        %p336 = pneg %p106
        %p337 = pneg %p130
        %p338 = pneg %p127
        %p339 = pneg %p151
        %p340 = pneg %p148
        %p341 = pneg %p172
        %p342 = pneg %p169
        %p343 = pneg %p193
        %p344 = pneg %p190
        %p345 = pneg %p214
        %p346 = pneg %p211
        %p347 = pneg %p242
        %p348 = pneg %p239
        %s349 = sand.u32 %s229, 1
        %s350 = scalar_lea.sflag [#allocation3], %s349
        %s351 = sand.u32 %s229, 1
        %s352 = smul.addr %s351, 256
        %s353 = scalar_lea.vmem [#allocation2], %s352
        %s354 = smul.u32 32, %s27
        %p355 = scmp.lt.s32.totalorder %s26, 1
        %s356 = scalar_select %p355, %s26, 1
        %p357 = scmp.lt.s32.totalorder %s354, 31
        %s358 = scalar_select %p357, %s354, 31
        %s359 = smul.addr %s356, 32
        %s360 = sadd.s32 %s358, %s359
        %s361 = smul.addr %s360, 8
        %s362 = scalar_lea.vmem %s0, %s361
        %s363 = smul.u32 32, %s27
        %p364 = scmp.lt.s32.totalorder %s26, 1
        %s365 = scalar_select %p364, %s26, 1
        %s366 = smul.addr %s365, 16
        %s367 = smul.addr %s366, 4
        %s368 = scalar_lea.vmem %s1, %s367
        %p369 = scmp.lt.s32.totalorder %s26, 1
        %s370 = scalar_select %p369, %s26, 1
        %s371 = smul.addr %s370, 16
        %s372 = smul.addr %s371, 4
        %s373 = scalar_lea.vmem %s2, %s372
        %s374 = smul.u32 32, %s27
        %v376 = vld [vmem:[%s362] sm:$0xff]
        %v377 = vld [vmem:[%s362 + $0x8] sm:$0xff]
        %v378 = vld [vmem:[%s362 + $0x10] sm:$0xff]
        %v379 = vld [vmem:[%s362 + $0x18] sm:$0xff]
        %v380 = vld [vmem:[%s362 + $0x20] sm:$0xff]
        %v381 = vld [vmem:[%s362 + $0x28] sm:$0xff]
        %v382 = vld [vmem:[%s362 + $0x30] sm:$0xff]
        %v383 = vld [vmem:[%s362 + $0x38] sm:$0xff]
        %v384 = vld [vmem:[%s362 + $0x40] sm:$0xff]
        %v385 = vld [vmem:[%s362 + $0x48] sm:$0xff]
        %v386 = vld [vmem:[%s362 + $0x50] sm:$0xff]
        %v387 = vld [vmem:[%s362 + $0x58] sm:$0xff]
        %v388 = vld [vmem:[%s362 + $0x60] sm:$0xff]
        %v389 = vld [vmem:[%s362 + $0x68] sm:$0xff]
        %v390 = vld [vmem:[%s362 + $0x70] sm:$0xff]
        %v391 = vld [vmem:[%s362 + $0x78] sm:$0xff]
        %v392 = vld [vmem:[%s362 + $0x80] sm:$0xff]
        %v393 = vld [vmem:[%s362 + $0x88] sm:$0xff]
        %v394 = vld [vmem:[%s362 + $0x90] sm:$0xff]
        %v395 = vld [vmem:[%s362 + $0x98] sm:$0xff]
        %v396 = vld [vmem:[%s362 + $0xa0] sm:$0xff]
        %v397 = vld [vmem:[%s362 + $0xa8] sm:$0xff]
        %v398 = vld [vmem:[%s362 + $0xb0] sm:$0xff]
        %v399 = vld [vmem:[%s362 + $0xb8] sm:$0xff]
        %v400 = vld [vmem:[%s362 + $0xc0] sm:$0xff]
        %v401 = vld [vmem:[%s362 + $0xc8] sm:$0xff]
        %v402 = vld [vmem:[%s362 + $0xd0] sm:$0xff]
        %v403 = vld [vmem:[%s362 + $0xd8] sm:$0xff]
        %v404 = vld [vmem:[%s362 + $0xe0] sm:$0xff]
        %v405 = vld [vmem:[%s362 + $0xe8] sm:$0xff]
        %v406 = vld [vmem:[%s362 + $0xf0] sm:$0xff]
        %v407 = vld [vmem:[%s362 + $0xf8] sm:$0xff]
        %v408 = vpack.c.bf16 %v377, %v376
        %v409 = vpack.c.bf16 %v379, %v378
        %v410 = vpack.c.bf16 %v381, %v380
        %v411 = vpack.c.bf16 %v383, %v382
        %v412 = vpack.c.bf16 %v385, %v384
        %v413 = vpack.c.bf16 %v387, %v386
        %v414 = vpack.c.bf16 %v389, %v388
        %v415 = vpack.c.bf16 %v391, %v390
        %v416 = vpack.c.bf16 %v393, %v392
        %v417 = vpack.c.bf16 %v395, %v394
        %v418 = vpack.c.bf16 %v397, %v396
        %v419 = vpack.c.bf16 %v399, %v398
        %v420 = vpack.c.bf16 %v401, %v400
        %v421 = vpack.c.bf16 %v403, %v402
        %v422 = vpack.c.bf16 %v405, %v404
        %v423 = vpack.c.bf16 %v407, %v406
        %v424 = vld [vmem:[%s4] sm:$0xf]
        %v425 = vld [vmem:[%s4 + $0x4] sm:$0xf]
        %v426 = vld [vmem:[%s4 + $0x8] sm:$0xf]
        %v427 = vld [vmem:[%s4 + $0xc] sm:$0xf]
        %v428 = vld [vmem:[%s4 + $0x10] sm:$0xf]
        %v429 = vld [vmem:[%s4 + $0x14] sm:$0xf]
        %v430 = vld [vmem:[%s4 + $0x18] sm:$0xf]
        %v431 = vld [vmem:[%s4 + $0x1c] sm:$0xf]
        %v432 = vld [vmem:[%s4 + $0x20] sm:$0xf]
        %v433 = vld [vmem:[%s4 + $0x24] sm:$0xf]
        %v434 = vld [vmem:[%s4 + $0x28] sm:$0xf]
        %v435 = vld [vmem:[%s4 + $0x2c] sm:$0xf]
        %v436 = vld [vmem:[%s4 + $0x30] sm:$0xf]
        %v437 = vld [vmem:[%s4 + $0x34] sm:$0xf]
        %v438 = vld [vmem:[%s4 + $0x38] sm:$0xf]
        %v439 = vld [vmem:[%s4 + $0x3c] sm:$0xf]
        %v440 = vld [vmem:[%s5] sm:$0x1]
        %v442 = vlaneseq
        %v443 = vshrl.u32 %v442, 7
        %v444 = vsub.s32 0, %v443
        %v445 = vrot.slane %v440, %v444
        %v463 = vunpack.c.l.b16 %v424
        %v464 = vunpack.c.l.b16 %v425
        %v465 = vunpack.c.l.b16 %v426
        %v466 = vunpack.c.l.b16 %v427
        %v467 = vunpack.c.l.b16 %v428
        %v468 = vunpack.c.l.b16 %v429
        %v469 = vunpack.c.l.b16 %v430
        %v470 = vunpack.c.l.b16 %v431
        %v471 = vunpack.c.l.b16 %v432
        %v472 = vunpack.c.l.b16 %v433
        %v473 = vunpack.c.l.b16 %v434
        %v474 = vunpack.c.l.b16 %v435
        %v475 = vunpack.c.l.b16 %v436
        %v476 = vunpack.c.l.b16 %v437
        %v477 = vunpack.c.l.b16 %v438
        %v478 = vunpack.c.l.b16 %v439
        %v479 = vpack.c.b16 %v464, %v463
        %v480 = vpack.c.b16 %v466, %v465
        %v481 = vpack.c.b16 %v468, %v467
        %v482 = vpack.c.b16 %v470, %v469
        %v483 = vpack.c.b16 %v472, %v471
        %v484 = vpack.c.b16 %v474, %v473
        %v485 = vpack.c.b16 %v476, %v475
        %v486 = vpack.c.b16 %v478, %v477
        %495 = vmatprep.subr.bf16.mxu0 0
        %496 = vmatpush1.bf16.msra.mxu0 %v479
        %497 = vmatprep.subr.bf16.mxu0 0
        %498 = vmatpush1.bf16.msra.mxu0 %v480
        %499 = vmatprep.subr.bf16.mxu0 0
        %500 = vmatpush1.bf16.msra.mxu0 %v481
        %501 = vmatprep.subr.bf16.mxu0 0
        %502 = vmatpush1.bf16.msra.mxu0 %v482
        %503 = vmatprep.subr.bf16.mxu0 0
        %504 = vmatpush1.bf16.msra.mxu0 %v483
        %505 = vmatprep.subr.bf16.mxu0 0
        %506 = vmatpush1.bf16.msra.mxu0 %v484
        %507 = vmatprep.subr.bf16.mxu0 0
        %508 = vmatpush1.bf16.msra.mxu0 %v485
        %509 = vmatprep.subr.bf16.mxu0 0
        %510 = vmatpush1.bf16.msra.mxu0 %v486
        %511 = vmatprep.subr.bf16.mxu0 0
        %512 = vmatpush1.bf16.msra.mxu0 0
        %513 = vmatprep.subr.bf16.mxu0 0
        %514 = vmatpush1.bf16.msra.mxu0 0
        %515 = vmatprep.subr.bf16.mxu0 0
        %516 = vmatpush1.bf16.msra.mxu0 0
        %517 = vmatprep.subr.bf16.mxu0 0
        %518 = vmatpush1.bf16.msra.mxu0 0
        %519 = vmatprep.subr.bf16.mxu0 0
        %520 = vmatpush1.bf16.msra.mxu0 0
        %521 = vmatprep.subr.bf16.mxu0 0
        %522 = vmatpush1.bf16.msra.mxu0 0
        %523 = vmatprep.subr.bf16.mxu0 0
        %524 = vmatpush1.bf16.msra.mxu0 0
        %525 = vmatprep.subr.bf16.mxu0 0
        %526 = vmatpush1.bf16.msra.mxu0 0
        %527 = vmatprep.mubr.bf16.mxu0 0
        %528 = vmatmul.mubr.bf16.gmra.mrb[0].mxu0 %v408
        %v529 = vpop.f32.mrb[0].mxu0
        %v530 = vadd.f32 %v445, %v529
        %v531 = vpop.f32.mrb[0].mxu0
        %v532 = vpop.f32.mrb[0].mxu0
        %v533 = vadd.f32 %v445, %v532
        %v534 = vpop.f32.mrb[0].mxu0
        %535 = vmatprep.mubr.bf16.mxu0 0
        %536 = vmatmul.mubr.bf16.gmra.mrb[0].mxu0 %v409
        %v537 = vpop.f32.mrb[0].mxu0
        %v538 = vadd.f32 %v445, %v537
        %v539 = vpop.f32.mrb[0].mxu0
        %v540 = vpop.f32.mrb[0].mxu0
        %v541 = vadd.f32 %v445, %v540
        %v542 = vpop.f32.mrb[0].mxu0
        %543 = vmatprep.mubr.bf16.mxu0 0
        %544 = vmatmul.mubr.bf16.gmra.mrb[0].mxu0 %v410
        %v545 = vpop.f32.mrb[0].mxu0
        %v546 = vadd.f32 %v445, %v545
        %v547 = vpop.f32.mrb[0].mxu0
        %v548 = vpop.f32.mrb[0].mxu0
        %v549 = vadd.f32 %v445, %v548
        %v550 = vpop.f32.mrb[0].mxu0
        %551 = vmatprep.mubr.bf16.mxu0 0
        %552 = vmatmul.mubr.bf16.gmra.mrb[0].mxu0 %v411
        %v553 = vpop.f32.mrb[0].mxu0
        %v554 = vadd.f32 %v445, %v553
        %v555 = vpop.f32.mrb[0].mxu0
        %v556 = vpop.f32.mrb[0].mxu0
        %v557 = vadd.f32 %v445, %v556
        %v558 = vpop.f32.mrb[0].mxu0
        %559 = vmatprep.mubr.bf16.mxu0 0
        %560 = vmatmul.mubr.bf16.gmra.mrb[0].mxu0 %v412
        %v561 = vpop.f32.mrb[0].mxu0
        %v562 = vadd.f32 %v445, %v561
        %v563 = vpop.f32.mrb[0].mxu0
        %v564 = vpop.f32.mrb[0].mxu0
        %v565 = vadd.f32 %v445, %v564
        %v566 = vpop.f32.mrb[0].mxu0
        %567 = vmatprep.mubr.bf16.mxu0 0
        %568 = vmatmul.mubr.bf16.gmra.mrb[0].mxu0 %v413
        %v569 = vpop.f32.mrb[0].mxu0
        %v570 = vadd.f32 %v445, %v569
        %v571 = vpop.f32.mrb[0].mxu0
        %v572 = vpop.f32.mrb[0].mxu0
        %v573 = vadd.f32 %v445, %v572
        %v574 = vpop.f32.mrb[0].mxu0
        %575 = vmatprep.mubr.bf16.mxu0 0
        %576 = vmatmul.mubr.bf16.gmra.mrb[0].mxu0 %v414
        %v577 = vpop.f32.mrb[0].mxu0
        %v578 = vadd.f32 %v445, %v577
        %v579 = vpop.f32.mrb[0].mxu0
        %v580 = vpop.f32.mrb[0].mxu0
        %v581 = vadd.f32 %v445, %v580
        %v582 = vpop.f32.mrb[0].mxu0
        %583 = vmatprep.mubr.bf16.mxu0 0
        %584 = vmatmul.mubr.bf16.gmra.mrb[0].mxu0 %v415
        %v585 = vpop.f32.mrb[0].mxu0
        %v586 = vadd.f32 %v445, %v585
        %v587 = vpop.f32.mrb[0].mxu0
        %v588 = vpop.f32.mrb[0].mxu0
        %v589 = vadd.f32 %v445, %v588
        %v590 = vpop.f32.mrb[0].mxu0
        %591 = vmatprep.mubr.bf16.mxu0 0
        %592 = vmatmul.mubr.bf16.gmra.mrb[0].mxu0 %v416
        %v593 = vpop.f32.mrb[0].mxu0
        %v594 = vadd.f32 %v445, %v593
        %v595 = vpop.f32.mrb[0].mxu0
        %v596 = vpop.f32.mrb[0].mxu0
        %v597 = vadd.f32 %v445, %v596
        %v598 = vpop.f32.mrb[0].mxu0
        %599 = vmatprep.mubr.bf16.mxu0 0
        %600 = vmatmul.mubr.bf16.gmra.mrb[0].mxu0 %v417
        %v601 = vpop.f32.mrb[0].mxu0
        %v602 = vadd.f32 %v445, %v601
        %v603 = vpop.f32.mrb[0].mxu0
        %v604 = vpop.f32.mrb[0].mxu0
        %v605 = vadd.f32 %v445, %v604
        %v606 = vpop.f32.mrb[0].mxu0
        %607 = vmatprep.mubr.bf16.mxu0 0
        %608 = vmatmul.mubr.bf16.gmra.mrb[0].mxu0 %v418
        %v609 = vpop.f32.mrb[0].mxu0
        %v610 = vadd.f32 %v445, %v609
        %v611 = vpop.f32.mrb[0].mxu0
        %v612 = vpop.f32.mrb[0].mxu0
        %v613 = vadd.f32 %v445, %v612
        %v614 = vpop.f32.mrb[0].mxu0
        %615 = vmatprep.mubr.bf16.mxu0 0
        %616 = vmatmul.mubr.bf16.gmra.mrb[0].mxu0 %v419
        %v617 = vpop.f32.mrb[0].mxu0
        %v618 = vadd.f32 %v445, %v617
        %v619 = vpop.f32.mrb[0].mxu0
        %v620 = vpop.f32.mrb[0].mxu0
        %v621 = vadd.f32 %v445, %v620
        %v622 = vpop.f32.mrb[0].mxu0
        %623 = vmatprep.mubr.bf16.mxu0 0
        %624 = vmatmul.mubr.bf16.gmra.mrb[0].mxu0 %v420
        %v625 = vpop.f32.mrb[0].mxu0
        %v626 = vadd.f32 %v445, %v625
        %v627 = vpop.f32.mrb[0].mxu0
        %v628 = vpop.f32.mrb[0].mxu0
        %v629 = vadd.f32 %v445, %v628
        %v630 = vpop.f32.mrb[0].mxu0
        %631 = vmatprep.mubr.bf16.mxu0 0
        %632 = vmatmul.mubr.bf16.gmra.mrb[0].mxu0 %v421
        %v633 = vpop.f32.mrb[0].mxu0
        %v634 = vadd.f32 %v445, %v633
        %v635 = vpop.f32.mrb[0].mxu0
        %v636 = vpop.f32.mrb[0].mxu0
        %v637 = vadd.f32 %v445, %v636
        %v638 = vpop.f32.mrb[0].mxu0
        %639 = vmatprep.mubr.bf16.mxu0 0
        %640 = vmatmul.mubr.bf16.gmra.mrb[0].mxu0 %v422
        %v641 = vpop.f32.mrb[0].mxu0
        %v642 = vadd.f32 %v445, %v641
        %v643 = vpop.f32.mrb[0].mxu0
        %v644 = vpop.f32.mrb[0].mxu0
        %v645 = vadd.f32 %v445, %v644
        %v646 = vpop.f32.mrb[0].mxu0
        %647 = vmatprep.mubr.bf16.mxu0 0
        %648 = vmatmul.mubr.bf16.gmra.mrb[0].mxu0 %v423
        %v649 = vpop.f32.mrb[0].mxu0
        %v650 = vadd.f32 %v445, %v649
        %v651 = vpop.f32.mrb[0].mxu0
        %v652 = vpop.f32.mrb[0].mxu0
        %v653 = vadd.f32 %v445, %v652
        %v654 = vpop.f32.mrb[0].mxu0
        %655 = vdwg.mxu0
        %v656 = vpack.c.bf16 %v533, %v530
        %v657 = vpack.c.bf16 %v541, %v538
        %v658 = vpack.c.bf16 %v549, %v546
        %v659 = vpack.c.bf16 %v557, %v554
        %v660 = vpack.c.bf16 %v565, %v562
        %v661 = vpack.c.bf16 %v573, %v570
        %v662 = vpack.c.bf16 %v581, %v578
        %v663 = vpack.c.bf16 %v589, %v586
        %v664 = vpack.c.bf16 %v597, %v594
        %v665 = vpack.c.bf16 %v605, %v602
        %v666 = vpack.c.bf16 %v613, %v610
        %v667 = vpack.c.bf16 %v621, %v618
        %v668 = vpack.c.bf16 %v629, %v626
        %v669 = vpack.c.bf16 %v637, %v634
        %v670 = vpack.c.bf16 %v645, %v642
        %v671 = vpack.c.bf16 %v653, %v650
        %v672 = vld [vmem:[%s368] sm:$0xf]
        %v673 = vld [vmem:[%s368 + $0x4] sm:$0xf]
        %v674 = vld [vmem:[%s368 + $0x8] sm:$0xf]
        %v675 = vld [vmem:[%s368 + $0xc] sm:$0xf]
        %v676 = vld [vmem:[%s368 + $0x10] sm:$0xf]
        %v677 = vld [vmem:[%s368 + $0x14] sm:$0xf]
        %v678 = vld [vmem:[%s368 + $0x18] sm:$0xf]
        %v679 = vld [vmem:[%s368 + $0x1c] sm:$0xf]
        %v680 = vld [vmem:[%s368 + $0x20] sm:$0xf]
        %v681 = vld [vmem:[%s368 + $0x24] sm:$0xf]
        %v682 = vld [vmem:[%s368 + $0x28] sm:$0xf]
        %v683 = vld [vmem:[%s368 + $0x2c] sm:$0xf]
        %v684 = vld [vmem:[%s368 + $0x30] sm:$0xf]
        %v685 = vld [vmem:[%s368 + $0x34] sm:$0xf]
        %v686 = vld [vmem:[%s368 + $0x38] sm:$0xf]
        %v687 = vld [vmem:[%s368 + $0x3c] sm:$0xf]
        %v688 = vld [vmem:[%s3] sm:$0x1]
        %v690 = vlaneseq
        %v691 = vshrl.u32 %v690, 7
        %v692 = vsub.s32 0, %v691
        %v693 = vrot.slane %v688, %v692
        %v711 = vunpack.c.l.b16 %v672
        %v712 = vunpack.c.l.b16 %v673
        %v713 = vunpack.c.l.b16 %v674
        %v714 = vunpack.c.l.b16 %v675
        %v715 = vunpack.c.l.b16 %v676
        %v716 = vunpack.c.l.b16 %v677
        %v717 = vunpack.c.l.b16 %v678
        %v718 = vunpack.c.l.b16 %v679
        %v719 = vunpack.c.l.b16 %v680
        %v720 = vunpack.c.l.b16 %v681
        %v721 = vunpack.c.l.b16 %v682
        %v722 = vunpack.c.l.b16 %v683
        %v723 = vunpack.c.l.b16 %v684
        %v724 = vunpack.c.l.b16 %v685
        %v725 = vunpack.c.l.b16 %v686
        %v726 = vunpack.c.l.b16 %v687
        %v727 = vpack.c.b16 %v712, %v711
        %v728 = vpack.c.b16 %v714, %v713
        %v729 = vpack.c.b16 %v716, %v715
        %v730 = vpack.c.b16 %v718, %v717
        %v731 = vpack.c.b16 %v720, %v719
        %v732 = vpack.c.b16 %v722, %v721
        %v733 = vpack.c.b16 %v724, %v723
        %v734 = vpack.c.b16 %v726, %v725
        %vm735 = vcmask 523264
        %v737 = vsel %vm735, %v656, 0
        %v740 = vsel %vm735, %v657, 0
        %v743 = vsel %vm735, %v658, 0
        %v746 = vsel %vm735, %v659, 0
        %v749 = vsel %vm735, %v660, 0
        %v752 = vsel %vm735, %v661, 0
        %v755 = vsel %vm735, %v662, 0
        %v758 = vsel %vm735, %v663, 0
        %v761 = vsel %vm735, %v664, 0
        %v764 = vsel %vm735, %v665, 0
        %v767 = vsel %vm735, %v666, 0
        %v770 = vsel %vm735, %v667, 0
        %v773 = vsel %vm735, %v668, 0
        %v776 = vsel %vm735, %v669, 0
        %v779 = vsel %vm735, %v670, 0
        %v782 = vsel %vm735, %v671, 0
        %v785 = vsel %vm735, %v727, 0
        %v788 = vsel %vm735, %v728, 0
        %v791 = vsel %vm735, %v729, 0
        %v794 = vsel %vm735, %v730, 0
        %v797 = vsel %vm735, %v731, 0
        %v800 = vsel %vm735, %v732, 0
        %v803 = vsel %vm735, %v733, 0
        %v806 = vsel %vm735, %v734, 0
        %808 = vmatprep.subr.bf16.mxu0 0
        %809 = vmatpush1.bf16.xpose.msra.mxu0 %v785
        %810 = vmatprep.subr.bf16.mxu0 0
        %811 = vmatpush1.bf16.xpose.msra.mxu0 %v788
        %812 = vmatprep.subr.bf16.mxu0 0
        %813 = vmatpush1.bf16.xpose.msra.mxu0 %v791
        %814 = vmatprep.subr.bf16.mxu0 0
        %815 = vmatpush1.bf16.xpose.msra.mxu0 %v794
        %816 = vmatprep.subr.bf16.mxu0 0
        %817 = vmatpush1.bf16.xpose.msra.mxu0 %v797
        %818 = vmatprep.subr.bf16.mxu0 0
        %819 = vmatpush1.bf16.xpose.msra.mxu0 %v800
        %820 = vmatprep.subr.bf16.mxu0 0
        %821 = vmatpush1.bf16.xpose.msra.mxu0 %v803
        %822 = vmatprep.subr.bf16.mxu0 0
        %823 = vmatpush1.bf16.xpose.msra.mxu0 %v806
        %824 = vmatprep.subr.bf16.mxu0 0
        %825 = vmatpush1.bf16.xpose.msra.mxu0 0
        %826 = vmatprep.subr.bf16.mxu0 0
        %827 = vmatpush1.bf16.xpose.msra.mxu0 0
        %828 = vmatprep.subr.bf16.mxu0 0
        %829 = vmatpush1.bf16.xpose.msra.mxu0 0
        %830 = vmatprep.subr.bf16.mxu0 0
        %831 = vmatpush1.bf16.xpose.msra.mxu0 0
        %832 = vmatprep.subr.bf16.mxu0 0
        %833 = vmatpush1.bf16.xpose.msra.mxu0 0
        %834 = vmatprep.subr.bf16.mxu0 0
        %835 = vmatpush1.bf16.xpose.msra.mxu0 0
        %836 = vmatprep.subr.bf16.mxu0 0
        %837 = vmatpush1.bf16.xpose.msra.mxu0 0
        %838 = vmatprep.subr.bf16.mxu0 0
        %839 = vmatpush1.bf16.xpose.msra.mxu0 0
        %840 = vmatprep.mubr.bf16.mxu0 0
        %841 = vmatmul.mubr.bf16.gmra.mrb[0].mxu0 %v737
        %v842 = vpop.f32.mrb[0].mxu0
        %v843 = vadd.f32 %v693, %v842
        %v844 = vpop.f32.mrb[0].mxu0
        %v845 = vpop.f32.mrb[0].mxu0
        %v846 = vadd.f32 %v693, %v845
        %v847 = vpop.f32.mrb[0].mxu0
        %848 = vmatprep.mubr.bf16.mxu0 0
        %849 = vmatmul.mubr.bf16.gmra.mrb[0].mxu0 %v740
        %v850 = vpop.f32.mrb[0].mxu0
        %v851 = vadd.f32 %v693, %v850
        %v852 = vpop.f32.mrb[0].mxu0
        %v853 = vpop.f32.mrb[0].mxu0
        %v854 = vadd.f32 %v693, %v853
        %v855 = vpop.f32.mrb[0].mxu0
        %856 = vmatprep.mubr.bf16.mxu0 0
        %857 = vmatmul.mubr.bf16.gmra.mrb[0].mxu0 %v743
        %v858 = vpop.f32.mrb[0].mxu0
        %v859 = vadd.f32 %v693, %v858
        %v860 = vpop.f32.mrb[0].mxu0
        %v861 = vpop.f32.mrb[0].mxu0
        %v862 = vadd.f32 %v693, %v861
        %v863 = vpop.f32.mrb[0].mxu0
        %864 = vmatprep.mubr.bf16.mxu0 0
        %865 = vmatmul.mubr.bf16.gmra.mrb[0].mxu0 %v746
        %v866 = vpop.f32.mrb[0].mxu0
        %v867 = vadd.f32 %v693, %v866
        %v868 = vpop.f32.mrb[0].mxu0
        %v869 = vpop.f32.mrb[0].mxu0
        %v870 = vadd.f32 %v693, %v869
        %v871 = vpop.f32.mrb[0].mxu0
        %872 = vmatprep.mubr.bf16.mxu0 0
        %873 = vmatmul.mubr.bf16.gmra.mrb[0].mxu0 %v749
        %v874 = vpop.f32.mrb[0].mxu0
        %v875 = vadd.f32 %v693, %v874
        %v876 = vpop.f32.mrb[0].mxu0
        %v877 = vpop.f32.mrb[0].mxu0
        %v878 = vadd.f32 %v693, %v877
        %v879 = vpop.f32.mrb[0].mxu0
        %880 = vmatprep.mubr.bf16.mxu0 0
        %881 = vmatmul.mubr.bf16.gmra.mrb[0].mxu0 %v752
        %v882 = vpop.f32.mrb[0].mxu0
        %v883 = vadd.f32 %v693, %v882
        %v884 = vpop.f32.mrb[0].mxu0
        %v885 = vpop.f32.mrb[0].mxu0
        %v886 = vadd.f32 %v693, %v885
        %v887 = vpop.f32.mrb[0].mxu0
        %888 = vmatprep.mubr.bf16.mxu0 0
        %889 = vmatmul.mubr.bf16.gmra.mrb[0].mxu0 %v755
        %v890 = vpop.f32.mrb[0].mxu0
        %v891 = vadd.f32 %v693, %v890
        %v892 = vpop.f32.mrb[0].mxu0
        %v893 = vpop.f32.mrb[0].mxu0
        %v894 = vadd.f32 %v693, %v893
        %v895 = vpop.f32.mrb[0].mxu0
        %896 = vmatprep.mubr.bf16.mxu0 0
        %897 = vmatmul.mubr.bf16.gmra.mrb[0].mxu0 %v758
        %v898 = vpop.f32.mrb[0].mxu0
        %v899 = vadd.f32 %v693, %v898
        %v900 = vpop.f32.mrb[0].mxu0
        %v901 = vpop.f32.mrb[0].mxu0
        %v902 = vadd.f32 %v693, %v901
        %v903 = vpop.f32.mrb[0].mxu0
        %904 = vmatprep.mubr.bf16.mxu0 0
        %905 = vmatmul.mubr.bf16.gmra.mrb[0].mxu0 %v761
        %v906 = vpop.f32.mrb[0].mxu0
        %v907 = vadd.f32 %v693, %v906
        %v908 = vpop.f32.mrb[0].mxu0
        %v909 = vpop.f32.mrb[0].mxu0
        %v910 = vadd.f32 %v693, %v909
        %v911 = vpop.f32.mrb[0].mxu0
        %912 = vmatprep.mubr.bf16.mxu0 0
        %913 = vmatmul.mubr.bf16.gmra.mrb[0].mxu0 %v764
        %v914 = vpop.f32.mrb[0].mxu0
        %v915 = vadd.f32 %v693, %v914
        %v916 = vpop.f32.mrb[0].mxu0
        %v917 = vpop.f32.mrb[0].mxu0
        %v918 = vadd.f32 %v693, %v917
        %v919 = vpop.f32.mrb[0].mxu0
        %920 = vmatprep.mubr.bf16.mxu0 0
        %921 = vmatmul.mubr.bf16.gmra.mrb[0].mxu0 %v767
        %v922 = vpop.f32.mrb[0].mxu0
        %v923 = vadd.f32 %v693, %v922
        %v924 = vpop.f32.mrb[0].mxu0
        %v925 = vpop.f32.mrb[0].mxu0
        %v926 = vadd.f32 %v693, %v925
        %v927 = vpop.f32.mrb[0].mxu0
        %928 = vmatprep.mubr.bf16.mxu0 0
        %929 = vmatmul.mubr.bf16.gmra.mrb[0].mxu0 %v770
        %v930 = vpop.f32.mrb[0].mxu0
        %v931 = vadd.f32 %v693, %v930
        %v932 = vpop.f32.mrb[0].mxu0
        %v933 = vpop.f32.mrb[0].mxu0
        %v934 = vadd.f32 %v693, %v933
        %v935 = vpop.f32.mrb[0].mxu0
        %936 = vmatprep.mubr.bf16.mxu0 0
        %937 = vmatmul.mubr.bf16.gmra.mrb[0].mxu0 %v773
        %v938 = vpop.f32.mrb[0].mxu0
        %v939 = vadd.f32 %v693, %v938
        %v940 = vpop.f32.mrb[0].mxu0
        %v941 = vpop.f32.mrb[0].mxu0
        %v942 = vadd.f32 %v693, %v941
        %v943 = vpop.f32.mrb[0].mxu0
        %944 = vmatprep.mubr.bf16.mxu0 0
        %945 = vmatmul.mubr.bf16.gmra.mrb[0].mxu0 %v776
        %v946 = vpop.f32.mrb[0].mxu0
        %v947 = vadd.f32 %v693, %v946
        %v948 = vpop.f32.mrb[0].mxu0
        %v949 = vpop.f32.mrb[0].mxu0
        %v950 = vadd.f32 %v693, %v949
        %v951 = vpop.f32.mrb[0].mxu0
        %952 = vmatprep.mubr.bf16.mxu0 0
        %953 = vmatmul.mubr.bf16.gmra.mrb[0].mxu0 %v779
        %v954 = vpop.f32.mrb[0].mxu0
        %v955 = vadd.f32 %v693, %v954
        %v956 = vpop.f32.mrb[0].mxu0
        %v957 = vpop.f32.mrb[0].mxu0
        %v958 = vadd.f32 %v693, %v957
        %v959 = vpop.f32.mrb[0].mxu0
        %960 = vmatprep.mubr.bf16.mxu0 0
        %961 = vmatmul.mubr.bf16.gmra.mrb[0].mxu0 %v782
        %v962 = vpop.f32.mrb[0].mxu0
        %v963 = vadd.f32 %v693, %v962
        %v964 = vpop.f32.mrb[0].mxu0
        %v965 = vpop.f32.mrb[0].mxu0
        %v966 = vadd.f32 %v693, %v965
        %v967 = vpop.f32.mrb[0].mxu0
        %968 = vdwg.mxu0
        %969 = vmax.xlane.f32.xlu0 %v843
        %v970 = vpop.xlane.xlu0 %969
        %971 = vmax.xlane.f32.xlu0 %v846
        %v972 = vpop.xlane.xlu0 %971
        %973 = vmax.xlane.f32.xlu0 %v851
        %v974 = vpop.xlane.xlu0 %973
        %975 = vmax.xlane.f32.xlu0 %v854
        %v976 = vpop.xlane.xlu0 %975
        %977 = vmax.xlane.f32.xlu0 %v859
        %v978 = vpop.xlane.xlu0 %977
        %979 = vmax.xlane.f32.xlu0 %v862
        %v980 = vpop.xlane.xlu0 %979
        %981 = vmax.xlane.f32.xlu0 %v867
        %v982 = vpop.xlane.xlu0 %981
        %983 = vmax.xlane.f32.xlu0 %v870
        %v984 = vpop.xlane.xlu0 %983
        %985 = vmax.xlane.f32.xlu0 %v875
        %v986 = vpop.xlane.xlu0 %985
        %987 = vmax.xlane.f32.xlu0 %v878
        %v988 = vpop.xlane.xlu0 %987
        %989 = vmax.xlane.f32.xlu0 %v883
        %v990 = vpop.xlane.xlu0 %989
        %991 = vmax.xlane.f32.xlu0 %v886
        %v992 = vpop.xlane.xlu0 %991
        %993 = vmax.xlane.f32.xlu0 %v891
        %v994 = vpop.xlane.xlu0 %993
        %995 = vmax.xlane.f32.xlu0 %v894
        %v996 = vpop.xlane.xlu0 %995
        %997 = vmax.xlane.f32.xlu0 %v899
        %v998 = vpop.xlane.xlu0 %997
        %999 = vmax.xlane.f32.xlu0 %v902
        %v1000 = vpop.xlane.xlu0 %999
        %1001 = vmax.xlane.f32.xlu0 %v907
        %v1002 = vpop.xlane.xlu0 %1001
        %1003 = vmax.xlane.f32.xlu0 %v910
        %v1004 = vpop.xlane.xlu0 %1003
        %1005 = vmax.xlane.f32.xlu0 %v915
        %v1006 = vpop.xlane.xlu0 %1005
        %1007 = vmax.xlane.f32.xlu0 %v918
        %v1008 = vpop.xlane.xlu0 %1007
        %1009 = vmax.xlane.f32.xlu0 %v923
        %v1010 = vpop.xlane.xlu0 %1009
        %1011 = vmax.xlane.f32.xlu0 %v926
        %v1012 = vpop.xlane.xlu0 %1011
        %1013 = vmax.xlane.f32.xlu0 %v931
        %v1014 = vpop.xlane.xlu0 %1013
        %1015 = vmax.xlane.f32.xlu0 %v934
        %v1016 = vpop.xlane.xlu0 %1015
        %1017 = vmax.xlane.f32.xlu0 %v939
        %v1018 = vpop.xlane.xlu0 %1017
        %1019 = vmax.xlane.f32.xlu0 %v942
        %v1020 = vpop.xlane.xlu0 %1019
        %1021 = vmax.xlane.f32.xlu0 %v947
        %v1022 = vpop.xlane.xlu0 %1021
        %1023 = vmax.xlane.f32.xlu0 %v950
        %v1024 = vpop.xlane.xlu0 %1023
        %1025 = vmax.xlane.f32.xlu0 %v955
        %v1026 = vpop.xlane.xlu0 %1025
        %1027 = vmax.xlane.f32.xlu0 %v958
        %v1028 = vpop.xlane.xlu0 %1027
        %1029 = vmax.xlane.f32.xlu0 %v963
        %v1030 = vpop.xlane.xlu0 %1029
        %1031 = vmax.xlane.f32.xlu0 %v966
        %v1032 = vpop.xlane.xlu0 %1031
        %v1033 = vsub.f32 %v843, %v970
        %v1034 = vsub.f32 %v846, %v972
        %v1035 = vsub.f32 %v851, %v974
        %v1036 = vsub.f32 %v854, %v976
        %v1037 = vsub.f32 %v859, %v978
        %v1038 = vsub.f32 %v862, %v980
        %v1039 = vsub.f32 %v867, %v982
        %v1040 = vsub.f32 %v870, %v984
        %v1041 = vsub.f32 %v875, %v986
        %v1042 = vsub.f32 %v878, %v988
        %v1043 = vsub.f32 %v883, %v990
        %v1044 = vsub.f32 %v886, %v992
        %v1045 = vsub.f32 %v891, %v994
        %v1046 = vsub.f32 %v894, %v996
        %v1047 = vsub.f32 %v899, %v998
        %v1048 = vsub.f32 %v902, %v1000
        %v1049 = vsub.f32 %v907, %v1002
        %v1050 = vsub.f32 %v910, %v1004
        %v1051 = vsub.f32 %v915, %v1006
        %v1052 = vsub.f32 %v918, %v1008
        %v1053 = vsub.f32 %v923, %v1010
        %v1054 = vsub.f32 %v926, %v1012
        %v1055 = vsub.f32 %v931, %v1014
        %v1056 = vsub.f32 %v934, %v1016
        %v1057 = vsub.f32 %v939, %v1018
        %v1058 = vsub.f32 %v942, %v1020
        %v1059 = vsub.f32 %v947, %v1022
        %v1060 = vsub.f32 %v950, %v1024
        %v1061 = vsub.f32 %v955, %v1026
        %v1062 = vsub.f32 %v958, %v1028
        %v1063 = vsub.f32 %v963, %v1030
        %v1064 = vsub.f32 %v966, %v1032
        %v1065 = vmul.f32 %v1033, 1.442695
        %v1066 = vpow.pop %v1065
        %v1067 = vmul.f32 %v1034, 1.442695
        %v1068 = vpow.pop %v1067
        %v1069 = vmul.f32 %v1035, 1.442695
        %v1070 = vpow.pop %v1069
        %v1071 = vmul.f32 %v1036, 1.442695
        %v1072 = vpow.pop %v1071
        %v1073 = vmul.f32 %v1037, 1.442695
        %v1074 = vpow.pop %v1073
        %v1075 = vmul.f32 %v1038, 1.442695
        %v1076 = vpow.pop %v1075
        %v1077 = vmul.f32 %v1039, 1.442695
        %v1078 = vpow.pop %v1077
        %v1079 = vmul.f32 %v1040, 1.442695
        %v1080 = vpow.pop %v1079
        %v1081 = vmul.f32 %v1041, 1.442695
        %v1082 = vpow.pop %v1081
        %v1083 = vmul.f32 %v1042, 1.442695
        %v1084 = vpow.pop %v1083
        %v1085 = vmul.f32 %v1043, 1.442695
        %v1086 = vpow.pop %v1085
        %v1087 = vmul.f32 %v1044, 1.442695
        %v1088 = vpow.pop %v1087
        %v1089 = vmul.f32 %v1045, 1.442695
        %v1090 = vpow.pop %v1089
        %v1091 = vmul.f32 %v1046, 1.442695
        %v1092 = vpow.pop %v1091
        %v1093 = vmul.f32 %v1047, 1.442695
        %v1094 = vpow.pop %v1093
        %v1095 = vmul.f32 %v1048, 1.442695
        %v1096 = vpow.pop %v1095
        %v1097 = vmul.f32 %v1049, 1.442695
        %v1098 = vpow.pop %v1097
        %v1099 = vmul.f32 %v1050, 1.442695
        %v1100 = vpow.pop %v1099
        %v1101 = vmul.f32 %v1051, 1.442695
        %v1102 = vpow.pop %v1101
        %v1103 = vmul.f32 %v1052, 1.442695
        %v1104 = vpow.pop %v1103
        %v1105 = vmul.f32 %v1053, 1.442695
        %v1106 = vpow.pop %v1105
        %v1107 = vmul.f32 %v1054, 1.442695
        %v1108 = vpow.pop %v1107
        %v1109 = vmul.f32 %v1055, 1.442695
        %v1110 = vpow.pop %v1109
        %v1111 = vmul.f32 %v1056, 1.442695
        %v1112 = vpow.pop %v1111
        %v1113 = vmul.f32 %v1057, 1.442695
        %v1114 = vpow.pop %v1113
        %v1115 = vmul.f32 %v1058, 1.442695
        %v1116 = vpow.pop %v1115
        %v1117 = vmul.f32 %v1059, 1.442695
        %v1118 = vpow.pop %v1117
        %v1119 = vmul.f32 %v1060, 1.442695
        %v1120 = vpow.pop %v1119
        %v1121 = vmul.f32 %v1061, 1.442695
        %v1122 = vpow.pop %v1121
        %v1123 = vmul.f32 %v1062, 1.442695
        %v1124 = vpow.pop %v1123
        %v1125 = vmul.f32 %v1063, 1.442695
        %v1126 = vpow.pop %v1125
        %v1127 = vmul.f32 %v1064, 1.442695
        %v1128 = vpow.pop %v1127
        %1129 = vadd.xlane.f32.xlu0 %v1066
        %v1130 = vpop.xlane.xlu0 %1129
        %1131 = vadd.xlane.f32.xlu0 %v1068
        %v1132 = vpop.xlane.xlu0 %1131
        %1133 = vadd.xlane.f32.xlu0 %v1070
        %v1134 = vpop.xlane.xlu0 %1133
        %1135 = vadd.xlane.f32.xlu0 %v1072
        %v1136 = vpop.xlane.xlu0 %1135
        %1137 = vadd.xlane.f32.xlu0 %v1074
        %v1138 = vpop.xlane.xlu0 %1137
        %1139 = vadd.xlane.f32.xlu0 %v1076
        %v1140 = vpop.xlane.xlu0 %1139
        %1141 = vadd.xlane.f32.xlu0 %v1078
        %v1142 = vpop.xlane.xlu0 %1141
        %1143 = vadd.xlane.f32.xlu0 %v1080
        %v1144 = vpop.xlane.xlu0 %1143
        %1145 = vadd.xlane.f32.xlu0 %v1082
        %v1146 = vpop.xlane.xlu0 %1145
        %1147 = vadd.xlane.f32.xlu0 %v1084
        %v1148 = vpop.xlane.xlu0 %1147
        %1149 = vadd.xlane.f32.xlu0 %v1086
        %v1150 = vpop.xlane.xlu0 %1149
        %1151 = vadd.xlane.f32.xlu0 %v1088
        %v1152 = vpop.xlane.xlu0 %1151
        %1153 = vadd.xlane.f32.xlu0 %v1090
        %v1154 = vpop.xlane.xlu0 %1153
        %1155 = vadd.xlane.f32.xlu0 %v1092
        %v1156 = vpop.xlane.xlu0 %1155
        %1157 = vadd.xlane.f32.xlu0 %v1094
        %v1158 = vpop.xlane.xlu0 %1157
        %1159 = vadd.xlane.f32.xlu0 %v1096
        %v1160 = vpop.xlane.xlu0 %1159
        %1161 = vadd.xlane.f32.xlu0 %v1098
        %v1162 = vpop.xlane.xlu0 %1161
        %1163 = vadd.xlane.f32.xlu0 %v1100
        %v1164 = vpop.xlane.xlu0 %1163
        %1165 = vadd.xlane.f32.xlu0 %v1102
        %v1166 = vpop.xlane.xlu0 %1165
        %1167 = vadd.xlane.f32.xlu0 %v1104
        %v1168 = vpop.xlane.xlu0 %1167
        %1169 = vadd.xlane.f32.xlu0 %v1106
        %v1170 = vpop.xlane.xlu0 %1169
        %1171 = vadd.xlane.f32.xlu0 %v1108
        %v1172 = vpop.xlane.xlu0 %1171
        %1173 = vadd.xlane.f32.xlu0 %v1110
        %v1174 = vpop.xlane.xlu0 %1173
        %1175 = vadd.xlane.f32.xlu0 %v1112
        %v1176 = vpop.xlane.xlu0 %1175
        %1177 = vadd.xlane.f32.xlu0 %v1114
        %v1178 = vpop.xlane.xlu0 %1177
        %1179 = vadd.xlane.f32.xlu0 %v1116
        %v1180 = vpop.xlane.xlu0 %1179
        %1181 = vadd.xlane.f32.xlu0 %v1118
        %v1182 = vpop.xlane.xlu0 %1181
        %1183 = vadd.xlane.f32.xlu0 %v1120
        %v1184 = vpop.xlane.xlu0 %1183
        %1185 = vadd.xlane.f32.xlu0 %v1122
        %v1186 = vpop.xlane.xlu0 %1185
        %1187 = vadd.xlane.f32.xlu0 %v1124
        %v1188 = vpop.xlane.xlu0 %1187
        %1189 = vadd.xlane.f32.xlu0 %v1126
        %v1190 = vpop.xlane.xlu0 %1189
        %1191 = vadd.xlane.f32.xlu0 %v1128
        %v1192 = vpop.xlane.xlu0 %1191
        %v1193 = vrcp.pop %v1130
        %v1194 = vrcp.pop %v1132
        %v1195 = vrcp.pop %v1134
        %v1196 = vrcp.pop %v1136
        %v1197 = vrcp.pop %v1138
        %v1198 = vrcp.pop %v1140
        %v1199 = vrcp.pop %v1142
        %v1200 = vrcp.pop %v1144
        %v1201 = vrcp.pop %v1146
        %v1202 = vrcp.pop %v1148
        %v1203 = vrcp.pop %v1150
        %v1204 = vrcp.pop %v1152
        %v1205 = vrcp.pop %v1154
        %v1206 = vrcp.pop %v1156
        %v1207 = vrcp.pop %v1158
        %v1208 = vrcp.pop %v1160
        %v1209 = vrcp.pop %v1162
        %v1210 = vrcp.pop %v1164
        %v1211 = vrcp.pop %v1166
        %v1212 = vrcp.pop %v1168
        %v1213 = vrcp.pop %v1170
        %v1214 = vrcp.pop %v1172
        %v1215 = vrcp.pop %v1174
        %v1216 = vrcp.pop %v1176
        %v1217 = vrcp.pop %v1178
        %v1218 = vrcp.pop %v1180
        %v1219 = vrcp.pop %v1182
        %v1220 = vrcp.pop %v1184
        %v1221 = vrcp.pop %v1186
        %v1222 = vrcp.pop %v1188
        %v1223 = vrcp.pop %v1190
        %v1224 = vrcp.pop %v1192
        %v1225 = vmul.f32 %v1130, %v1193
        %v1226 = vmul.f32 %v1132, %v1194
        %v1227 = vmul.f32 %v1134, %v1195
        %v1228 = vmul.f32 %v1136, %v1196
        %v1229 = vmul.f32 %v1138, %v1197
        %v1230 = vmul.f32 %v1140, %v1198
        %v1231 = vmul.f32 %v1142, %v1199
        %v1232 = vmul.f32 %v1144, %v1200
        %v1233 = vmul.f32 %v1146, %v1201
        %v1234 = vmul.f32 %v1148, %v1202
        %v1235 = vmul.f32 %v1150, %v1203
        %v1236 = vmul.f32 %v1152, %v1204
        %v1237 = vmul.f32 %v1154, %v1205
        %v1238 = vmul.f32 %v1156, %v1206
        %v1239 = vmul.f32 %v1158, %v1207
        %v1240 = vmul.f32 %v1160, %v1208
        %v1241 = vmul.f32 %v1162, %v1209
        %v1242 = vmul.f32 %v1164, %v1210
        %v1243 = vmul.f32 %v1166, %v1211
        %v1244 = vmul.f32 %v1168, %v1212
        %v1245 = vmul.f32 %v1170, %v1213
        %v1246 = vmul.f32 %v1172, %v1214
        %v1247 = vmul.f32 %v1174, %v1215
        %v1248 = vmul.f32 %v1176, %v1216
        %v1249 = vmul.f32 %v1178, %v1217
        %v1250 = vmul.f32 %v1180, %v1218
        %v1251 = vmul.f32 %v1182, %v1219
        %v1252 = vmul.f32 %v1184, %v1220
        %v1253 = vmul.f32 %v1186, %v1221
        %v1254 = vmul.f32 %v1188, %v1222
        %v1255 = vmul.f32 %v1190, %v1223
        %v1256 = vmul.f32 %v1192, %v1224
        %v1257 = vsub.f32 2.0, %v1225
        %v1258 = vsub.f32 2.0, %v1226
        %v1259 = vsub.f32 2.0, %v1227
        %v1260 = vsub.f32 2.0, %v1228
        %v1261 = vsub.f32 2.0, %v1229
        %v1262 = vsub.f32 2.0, %v1230
        %v1263 = vsub.f32 2.0, %v1231
        %v1264 = vsub.f32 2.0, %v1232
        %v1265 = vsub.f32 2.0, %v1233
        %v1266 = vsub.f32 2.0, %v1234
        %v1267 = vsub.f32 2.0, %v1235
        %v1268 = vsub.f32 2.0, %v1236
        %v1269 = vsub.f32 2.0, %v1237
        %v1270 = vsub.f32 2.0, %v1238
        %v1271 = vsub.f32 2.0, %v1239
        %v1272 = vsub.f32 2.0, %v1240
        %v1273 = vsub.f32 2.0, %v1241
        %v1274 = vsub.f32 2.0, %v1242
        %v1275 = vsub.f32 2.0, %v1243
        %v1276 = vsub.f32 2.0, %v1244
        %v1277 = vsub.f32 2.0, %v1245
        %v1278 = vsub.f32 2.0, %v1246
        %v1279 = vsub.f32 2.0, %v1247
        %v1280 = vsub.f32 2.0, %v1248
        %v1281 = vsub.f32 2.0, %v1249
        %v1282 = vsub.f32 2.0, %v1250
        %v1283 = vsub.f32 2.0, %v1251
        %v1284 = vsub.f32 2.0, %v1252
        %v1285 = vsub.f32 2.0, %v1253
        %v1286 = vsub.f32 2.0, %v1254
        %v1287 = vsub.f32 2.0, %v1255
        %v1288 = vsub.f32 2.0, %v1256
        %v1289 = vmul.f32 %v1193, %v1257
        %v1290 = vmul.f32 %v1194, %v1258
        %v1291 = vmul.f32 %v1195, %v1259
        %v1292 = vmul.f32 %v1196, %v1260
        %v1293 = vmul.f32 %v1197, %v1261
        %v1294 = vmul.f32 %v1198, %v1262
        %v1295 = vmul.f32 %v1199, %v1263
        %v1296 = vmul.f32 %v1200, %v1264
        %v1297 = vmul.f32 %v1201, %v1265
        %v1298 = vmul.f32 %v1202, %v1266
        %v1299 = vmul.f32 %v1203, %v1267
        %v1300 = vmul.f32 %v1204, %v1268
        %v1301 = vmul.f32 %v1205, %v1269
        %v1302 = vmul.f32 %v1206, %v1270
        %v1303 = vmul.f32 %v1207, %v1271
        %v1304 = vmul.f32 %v1208, %v1272
        %v1305 = vmul.f32 %v1209, %v1273
        %v1306 = vmul.f32 %v1210, %v1274
        %v1307 = vmul.f32 %v1211, %v1275
        %v1308 = vmul.f32 %v1212, %v1276
        %v1309 = vmul.f32 %v1213, %v1277
        %v1310 = vmul.f32 %v1214, %v1278
        %v1311 = vmul.f32 %v1215, %v1279
        %v1312 = vmul.f32 %v1216, %v1280
        %v1313 = vmul.f32 %v1217, %v1281
        %v1314 = vmul.f32 %v1218, %v1282
        %v1315 = vmul.f32 %v1219, %v1283
        %v1316 = vmul.f32 %v1220, %v1284
        %v1317 = vmul.f32 %v1221, %v1285
        %v1318 = vmul.f32 %v1222, %v1286
        %v1319 = vmul.f32 %v1223, %v1287
        %v1320 = vmul.f32 %v1224, %v1288
        %v1321 = vmul.f32 %v1066, %v1289
        %v1322 = vmul.f32 %v1068, %v1290
        %v1323 = vmul.f32 %v1070, %v1291
        %v1324 = vmul.f32 %v1072, %v1292
        %v1325 = vmul.f32 %v1074, %v1293
        %v1326 = vmul.f32 %v1076, %v1294
        %v1327 = vmul.f32 %v1078, %v1295
        %v1328 = vmul.f32 %v1080, %v1296
        %v1329 = vmul.f32 %v1082, %v1297
        %v1330 = vmul.f32 %v1084, %v1298
        %v1331 = vmul.f32 %v1086, %v1299
        %v1332 = vmul.f32 %v1088, %v1300
        %v1333 = vmul.f32 %v1090, %v1301
        %v1334 = vmul.f32 %v1092, %v1302
        %v1335 = vmul.f32 %v1094, %v1303
        %v1336 = vmul.f32 %v1096, %v1304
        %v1337 = vmul.f32 %v1098, %v1305
        %v1338 = vmul.f32 %v1100, %v1306
        %v1339 = vmul.f32 %v1102, %v1307
        %v1340 = vmul.f32 %v1104, %v1308
        %v1341 = vmul.f32 %v1106, %v1309
        %v1342 = vmul.f32 %v1108, %v1310
        %v1343 = vmul.f32 %v1110, %v1311
        %v1344 = vmul.f32 %v1112, %v1312
        %v1345 = vmul.f32 %v1114, %v1313
        %v1346 = vmul.f32 %v1116, %v1314
        %v1347 = vmul.f32 %v1118, %v1315
        %v1348 = vmul.f32 %v1120, %v1316
        %v1349 = vmul.f32 %v1122, %v1317
        %v1350 = vmul.f32 %v1124, %v1318
        %v1351 = vmul.f32 %v1126, %v1319
        %v1352 = vmul.f32 %v1128, %v1320
        %v1353 = vpack.c.bf16 %v1322, %v1321
        %v1354 = vpack.c.bf16 %v1324, %v1323
        %v1355 = vpack.c.bf16 %v1326, %v1325
        %v1356 = vpack.c.bf16 %v1328, %v1327
        %v1357 = vpack.c.bf16 %v1330, %v1329
        %v1358 = vpack.c.bf16 %v1332, %v1331
        %v1359 = vpack.c.bf16 %v1334, %v1333
        %v1360 = vpack.c.bf16 %v1336, %v1335
        %v1361 = vpack.c.bf16 %v1338, %v1337
        %v1362 = vpack.c.bf16 %v1340, %v1339
        %v1363 = vpack.c.bf16 %v1342, %v1341
        %v1364 = vpack.c.bf16 %v1344, %v1343
        %v1365 = vpack.c.bf16 %v1346, %v1345
        %v1366 = vpack.c.bf16 %v1348, %v1347
        %v1367 = vpack.c.bf16 %v1350, %v1349
        %v1368 = vpack.c.bf16 %v1352, %v1351
        %v1369 = vld [vmem:[%s373] sm:$0xf]
        %v1370 = vld [vmem:[%s373 + $0x4] sm:$0xf]
        %v1371 = vld [vmem:[%s373 + $0x8] sm:$0xf]
        %v1372 = vld [vmem:[%s373 + $0xc] sm:$0xf]
        %v1373 = vld [vmem:[%s373 + $0x10] sm:$0xf]
        %v1374 = vld [vmem:[%s373 + $0x14] sm:$0xf]
        %v1375 = vld [vmem:[%s373 + $0x18] sm:$0xf]
        %v1376 = vld [vmem:[%s373 + $0x1c] sm:$0xf]
        %v1377 = vld [vmem:[%s373 + $0x20] sm:$0xf]
        %v1378 = vld [vmem:[%s373 + $0x24] sm:$0xf]
        %v1379 = vld [vmem:[%s373 + $0x28] sm:$0xf]
        %v1380 = vld [vmem:[%s373 + $0x2c] sm:$0xf]
        %v1381 = vld [vmem:[%s373 + $0x30] sm:$0xf]
        %v1382 = vld [vmem:[%s373 + $0x34] sm:$0xf]
        %v1383 = vld [vmem:[%s373 + $0x38] sm:$0xf]
        %v1384 = vld [vmem:[%s373 + $0x3c] sm:$0xf]
        %v1401 = vunpack.c.l.b16 %v1369
        %v1402 = vunpack.c.l.b16 %v1370
        %v1403 = vunpack.c.l.b16 %v1371
        %v1404 = vunpack.c.l.b16 %v1372
        %v1405 = vunpack.c.l.b16 %v1373
        %v1406 = vunpack.c.l.b16 %v1374
        %v1407 = vunpack.c.l.b16 %v1375
        %v1408 = vunpack.c.l.b16 %v1376
        %v1409 = vunpack.c.l.b16 %v1377
        %v1410 = vunpack.c.l.b16 %v1378
        %v1411 = vunpack.c.l.b16 %v1379
        %v1412 = vunpack.c.l.b16 %v1380
        %v1413 = vunpack.c.l.b16 %v1381
        %v1414 = vunpack.c.l.b16 %v1382
        %v1415 = vunpack.c.l.b16 %v1383
        %v1416 = vunpack.c.l.b16 %v1384
        %v1417 = vpack.c.b16 %v1402, %v1401
        %v1418 = vpack.c.b16 %v1404, %v1403
        %v1419 = vpack.c.b16 %v1406, %v1405
        %v1420 = vpack.c.b16 %v1408, %v1407
        %v1421 = vpack.c.b16 %v1410, %v1409
        %v1422 = vpack.c.b16 %v1412, %v1411
        %v1423 = vpack.c.b16 %v1414, %v1413
        %v1424 = vpack.c.b16 %v1416, %v1415
        %1433 = vmatprep.subr.bf16.mxu0 0
        %1434 = vmatpush1.bf16.msra.mxu0 %v1417
        %1435 = vmatprep.subr.bf16.mxu0 0
        %1436 = vmatpush1.bf16.msra.mxu0 %v1418
        %1437 = vmatprep.subr.bf16.mxu0 0
        %1438 = vmatpush1.bf16.msra.mxu0 %v1419
        %1439 = vmatprep.subr.bf16.mxu0 0
        %1440 = vmatpush1.bf16.msra.mxu0 %v1420
        %1441 = vmatprep.subr.bf16.mxu0 0
        %1442 = vmatpush1.bf16.msra.mxu0 %v1421
        %1443 = vmatprep.subr.bf16.mxu0 0
        %1444 = vmatpush1.bf16.msra.mxu0 %v1422
        %1445 = vmatprep.subr.bf16.mxu0 0
        %1446 = vmatpush1.bf16.msra.mxu0 %v1423
        %1447 = vmatprep.subr.bf16.mxu0 0
        %1448 = vmatpush1.bf16.msra.mxu0 %v1424
        %1449 = vmatprep.subr.bf16.mxu0 0
        %1450 = vmatpush1.bf16.msra.mxu0 0
        %1451 = vmatprep.subr.bf16.mxu0 0
        %1452 = vmatpush1.bf16.msra.mxu0 0
        %1453 = vmatprep.subr.bf16.mxu0 0
        %1454 = vmatpush1.bf16.msra.mxu0 0
        %1455 = vmatprep.subr.bf16.mxu0 0
        %1456 = vmatpush1.bf16.msra.mxu0 0
        %1457 = vmatprep.subr.bf16.mxu0 0
        %1458 = vmatpush1.bf16.msra.mxu0 0
        %1459 = vmatprep.subr.bf16.mxu0 0
        %1460 = vmatpush1.bf16.msra.mxu0 0
        %1461 = vmatprep.subr.bf16.mxu0 0
        %1462 = vmatpush1.bf16.msra.mxu0 0
        %1463 = vmatprep.subr.bf16.mxu0 0
        %1464 = vmatpush1.bf16.msra.mxu0 0
        %1465 = vmatprep.mubr.bf16.mxu0 0
        %1466 = vmatmul.mubr.bf16.gmra.mrb[0].mxu0 %v1353
        %v1467 = vpop.f32.mrb[0].mxu0
        %v1468 = vadd.f32 0.0, %v1467
        %v1469 = vpop.f32.mrb[0].mxu0
        %v1470 = vpop.f32.mrb[0].mxu0
        %v1471 = vadd.f32 0.0, %v1470
        %v1472 = vpop.f32.mrb[0].mxu0
        %1473 = vmatprep.mubr.bf16.mxu0 0
        %1474 = vmatmul.mubr.bf16.gmra.mrb[0].mxu0 %v1354
        %v1475 = vpop.f32.mrb[0].mxu0
        %v1476 = vadd.f32 0.0, %v1475
        %v1477 = vpop.f32.mrb[0].mxu0
        %v1478 = vpop.f32.mrb[0].mxu0
        %v1479 = vadd.f32 0.0, %v1478
        %v1480 = vpop.f32.mrb[0].mxu0
        %1481 = vmatprep.mubr.bf16.mxu0 0
        %1482 = vmatmul.mubr.bf16.gmra.mrb[0].mxu0 %v1355
        %v1483 = vpop.f32.mrb[0].mxu0
        %v1484 = vadd.f32 0.0, %v1483
        %v1485 = vpop.f32.mrb[0].mxu0
        %v1486 = vpop.f32.mrb[0].mxu0
        %v1487 = vadd.f32 0.0, %v1486
        %v1488 = vpop.f32.mrb[0].mxu0
        %1489 = vmatprep.mubr.bf16.mxu0 0
        %1490 = vmatmul.mubr.bf16.gmra.mrb[0].mxu0 %v1356
        %v1491 = vpop.f32.mrb[0].mxu0
        %v1492 = vadd.f32 0.0, %v1491
        %v1493 = vpop.f32.mrb[0].mxu0
        %v1494 = vpop.f32.mrb[0].mxu0
        %v1495 = vadd.f32 0.0, %v1494
        %v1496 = vpop.f32.mrb[0].mxu0
        %1497 = vmatprep.mubr.bf16.mxu0 0
        %1498 = vmatmul.mubr.bf16.gmra.mrb[0].mxu0 %v1357
        %v1499 = vpop.f32.mrb[0].mxu0
        %v1500 = vadd.f32 0.0, %v1499
        %v1501 = vpop.f32.mrb[0].mxu0
        %v1502 = vpop.f32.mrb[0].mxu0
        %v1503 = vadd.f32 0.0, %v1502
        %v1504 = vpop.f32.mrb[0].mxu0
        %1505 = vmatprep.mubr.bf16.mxu0 0
        %1506 = vmatmul.mubr.bf16.gmra.mrb[0].mxu0 %v1358
        %v1507 = vpop.f32.mrb[0].mxu0
        %v1508 = vadd.f32 0.0, %v1507
        %v1509 = vpop.f32.mrb[0].mxu0
        %v1510 = vpop.f32.mrb[0].mxu0
        %v1511 = vadd.f32 0.0, %v1510
        %v1512 = vpop.f32.mrb[0].mxu0
        %1513 = vmatprep.mubr.bf16.mxu0 0
        %1514 = vmatmul.mubr.bf16.gmra.mrb[0].mxu0 %v1359
        %v1515 = vpop.f32.mrb[0].mxu0
        %v1516 = vadd.f32 0.0, %v1515
        %v1517 = vpop.f32.mrb[0].mxu0
        %v1518 = vpop.f32.mrb[0].mxu0
        %v1519 = vadd.f32 0.0, %v1518
        %v1520 = vpop.f32.mrb[0].mxu0
        %1521 = vmatprep.mubr.bf16.mxu0 0
        %1522 = vmatmul.mubr.bf16.gmra.mrb[0].mxu0 %v1360
        %v1523 = vpop.f32.mrb[0].mxu0
        %v1524 = vadd.f32 0.0, %v1523
        %v1525 = vpop.f32.mrb[0].mxu0
        %v1526 = vpop.f32.mrb[0].mxu0
        %v1527 = vadd.f32 0.0, %v1526
        %v1528 = vpop.f32.mrb[0].mxu0
        %1529 = vmatprep.mubr.bf16.mxu0 0
        %1530 = vmatmul.mubr.bf16.gmra.mrb[0].mxu0 %v1361
        %v1531 = vpop.f32.mrb[0].mxu0
        %v1532 = vadd.f32 0.0, %v1531
        %v1533 = vpop.f32.mrb[0].mxu0
        %v1534 = vpop.f32.mrb[0].mxu0
        %v1535 = vadd.f32 0.0, %v1534
        %v1536 = vpop.f32.mrb[0].mxu0
        %1537 = vmatprep.mubr.bf16.mxu0 0
        %1538 = vmatmul.mubr.bf16.gmra.mrb[0].mxu0 %v1362
        %v1539 = vpop.f32.mrb[0].mxu0
        %v1540 = vadd.f32 0.0, %v1539
        %v1541 = vpop.f32.mrb[0].mxu0
        %v1542 = vpop.f32.mrb[0].mxu0
        %v1543 = vadd.f32 0.0, %v1542
        %v1544 = vpop.f32.mrb[0].mxu0
        %1545 = vmatprep.mubr.bf16.mxu0 0
        %1546 = vmatmul.mubr.bf16.gmra.mrb[0].mxu0 %v1363
        %v1547 = vpop.f32.mrb[0].mxu0
        %v1548 = vadd.f32 0.0, %v1547
        %v1549 = vpop.f32.mrb[0].mxu0
        %v1550 = vpop.f32.mrb[0].mxu0
        %v1551 = vadd.f32 0.0, %v1550
        %v1552 = vpop.f32.mrb[0].mxu0
        %1553 = vmatprep.mubr.bf16.mxu0 0
        %1554 = vmatmul.mubr.bf16.gmra.mrb[0].mxu0 %v1364
        %v1555 = vpop.f32.mrb[0].mxu0
        %v1556 = vadd.f32 0.0, %v1555
        %v1557 = vpop.f32.mrb[0].mxu0
        %v1558 = vpop.f32.mrb[0].mxu0
        %v1559 = vadd.f32 0.0, %v1558
        %v1560 = vpop.f32.mrb[0].mxu0
        %1561 = vmatprep.mubr.bf16.mxu0 0
        %1562 = vmatmul.mubr.bf16.gmra.mrb[0].mxu0 %v1365
        %v1563 = vpop.f32.mrb[0].mxu0
        %v1564 = vadd.f32 0.0, %v1563
        %v1565 = vpop.f32.mrb[0].mxu0
        %v1566 = vpop.f32.mrb[0].mxu0
        %v1567 = vadd.f32 0.0, %v1566
        %v1568 = vpop.f32.mrb[0].mxu0
        %1569 = vmatprep.mubr.bf16.mxu0 0
        %1570 = vmatmul.mubr.bf16.gmra.mrb[0].mxu0 %v1366
        %v1571 = vpop.f32.mrb[0].mxu0
        %v1572 = vadd.f32 0.0, %v1571
        %v1573 = vpop.f32.mrb[0].mxu0
        %v1574 = vpop.f32.mrb[0].mxu0
        %v1575 = vadd.f32 0.0, %v1574
        %v1576 = vpop.f32.mrb[0].mxu0
        %1577 = vmatprep.mubr.bf16.mxu0 0
        %1578 = vmatmul.mubr.bf16.gmra.mrb[0].mxu0 %v1367
        %v1579 = vpop.f32.mrb[0].mxu0
        %v1580 = vadd.f32 0.0, %v1579
        %v1581 = vpop.f32.mrb[0].mxu0
        %v1582 = vpop.f32.mrb[0].mxu0
        %v1583 = vadd.f32 0.0, %v1582
        %v1584 = vpop.f32.mrb[0].mxu0
        %1585 = vmatprep.mubr.bf16.mxu0 0
        %1586 = vmatmul.mubr.bf16.gmra.mrb[0].mxu0 %v1368
        %v1587 = vpop.f32.mrb[0].mxu0
        %v1588 = vadd.f32 0.0, %v1587
        %v1589 = vpop.f32.mrb[0].mxu0
        %v1590 = vpop.f32.mrb[0].mxu0
        %v1591 = vadd.f32 0.0, %v1590
        %v1592 = vpop.f32.mrb[0].mxu0
        %1593 = vdwg.mxu0
        %v1594 = vpack.c.bf16 %v1471, %v1468
        %v1595 = vpack.c.bf16 %v1479, %v1476
        %v1596 = vpack.c.bf16 %v1487, %v1484
        %v1597 = vpack.c.bf16 %v1495, %v1492
        %v1598 = vpack.c.bf16 %v1503, %v1500
        %v1599 = vpack.c.bf16 %v1511, %v1508
        %v1600 = vpack.c.bf16 %v1519, %v1516
        %v1601 = vpack.c.bf16 %v1527, %v1524
        %v1602 = vpack.c.bf16 %v1535, %v1532
        %v1603 = vpack.c.bf16 %v1543, %v1540
        %v1604 = vpack.c.bf16 %v1551, %v1548
        %v1605 = vpack.c.bf16 %v1559, %v1556
        %v1606 = vpack.c.bf16 %v1567, %v1564
        %v1607 = vpack.c.bf16 %v1575, %v1572
        %v1608 = vpack.c.bf16 %v1583, %v1580
        %v1609 = vpack.c.bf16 %v1591, %v1588
        %v1610 = vld [vmem:[%s6] sm:$0xf]
        %v1611 = vld [vmem:[%s6 + $0x4] sm:$0xf]
        %v1612 = vld [vmem:[%s6 + $0x8] sm:$0xf]
        %v1613 = vld [vmem:[%s6 + $0xc] sm:$0xf]
        %v1614 = vld [vmem:[%s6 + $0x10] sm:$0xf]
        %v1615 = vld [vmem:[%s6 + $0x14] sm:$0xf]
        %v1616 = vld [vmem:[%s6 + $0x18] sm:$0xf]
        %v1617 = vld [vmem:[%s6 + $0x1c] sm:$0xf]
        %v1618 = vld [vmem:[%s7] sm:$0x1]
        %v1620 = vlaneseq
        %v1621 = vshrl.u32 %v1620, 7
        %v1622 = vsub.s32 0, %v1621
        %v1623 = vrot.slane %v1618, %v1622
        %v1633 = vunpack.c.l.b16 %v1610
        %v1634 = vunpack.c.l.b16 %v1611
        %v1635 = vunpack.c.l.b16 %v1612
        %v1636 = vunpack.c.l.b16 %v1613
        %v1637 = vunpack.c.l.b16 %v1614
        %v1638 = vunpack.c.l.b16 %v1615
        %v1639 = vunpack.c.l.b16 %v1616
        %v1640 = vunpack.c.l.b16 %v1617
        %v1641 = vpack.c.b16 %v1634, %v1633
        %v1642 = vpack.c.b16 %v1636, %v1635
        %v1643 = vpack.c.b16 %v1638, %v1637
        %v1644 = vpack.c.b16 %v1640, %v1639
        %v1650 = vsel %vm735, %v1594, 0
        %v1653 = vsel %vm735, %v1595, 0
        %v1656 = vsel %vm735, %v1596, 0
        %v1659 = vsel %vm735, %v1597, 0
        %v1662 = vsel %vm735, %v1598, 0
        %v1665 = vsel %vm735, %v1599, 0
        %v1668 = vsel %vm735, %v1600, 0
        %v1671 = vsel %vm735, %v1601, 0
        %v1674 = vsel %vm735, %v1602, 0
        %v1677 = vsel %vm735, %v1603, 0
        %v1680 = vsel %vm735, %v1604, 0
        %v1683 = vsel %vm735, %v1605, 0
        %v1686 = vsel %vm735, %v1606, 0
        %v1689 = vsel %vm735, %v1607, 0
        %v1692 = vsel %vm735, %v1608, 0
        %v1695 = vsel %vm735, %v1609, 0
        %1697 = vmatprep.subr.bf16.mxu0 0
        %1698 = vmatpush1.bf16.msra.mxu0 %v1641
        %1699 = vmatprep.subr.bf16.mxu0 0
        %1700 = vmatpush1.bf16.msra.mxu0 %v1642
        %1701 = vmatprep.subr.bf16.mxu0 0
        %1702 = vmatpush1.bf16.msra.mxu0 %v1643
        %1703 = vmatprep.subr.bf16.mxu0 0
        %1704 = vmatpush1.bf16.msra.mxu0 %v1644
        %1705 = vmatprep.subr.bf16.mxu0 0
        %1706 = vmatpush1.bf16.msra.mxu0 0
        %1707 = vmatprep.subr.bf16.mxu0 0
        %1708 = vmatpush1.bf16.msra.mxu0 0
        %1709 = vmatprep.subr.bf16.mxu0 0
        %1710 = vmatpush1.bf16.msra.mxu0 0
        %1711 = vmatprep.subr.bf16.mxu0 0
        %1712 = vmatpush1.bf16.msra.mxu0 0
        %1713 = vmatprep.subr.bf16.mxu0 0
        %1714 = vmatpush1.bf16.msra.mxu0 0
        %1715 = vmatprep.subr.bf16.mxu0 0
        %1716 = vmatpush1.bf16.msra.mxu0 0
        %1717 = vmatprep.subr.bf16.mxu0 0
        %1718 = vmatpush1.bf16.msra.mxu0 0
        %1719 = vmatprep.subr.bf16.mxu0 0
        %1720 = vmatpush1.bf16.msra.mxu0 0
        %1721 = vmatprep.subr.bf16.mxu0 0
        %1722 = vmatpush1.bf16.msra.mxu0 0
        %1723 = vmatprep.subr.bf16.mxu0 0
        %1724 = vmatpush1.bf16.msra.mxu0 0
        %1725 = vmatprep.subr.bf16.mxu0 0
        %1726 = vmatpush1.bf16.msra.mxu0 0
        %1727 = vmatprep.subr.bf16.mxu0 0
        %1728 = vmatpush1.bf16.msra.mxu0 0
        %1729 = vmatprep.mubr.bf16.mxu0 0
        %1730 = vmatmul.mubr.bf16.gmra.mrb[0].mxu0 %v1650
        %v1731 = vpop.f32.mrb[0].mxu0
        %v1732 = vadd.f32 %v1623, %v1731
        %v1733 = vpop.f32.mrb[0].mxu0
        %v1734 = vpop.f32.mrb[0].mxu0
        %v1735 = vadd.f32 %v1623, %v1734
        %v1736 = vpop.f32.mrb[0].mxu0
        %1737 = vmatprep.mubr.bf16.mxu0 0
        %1738 = vmatmul.mubr.bf16.gmra.mrb[0].mxu0 %v1653
        %v1739 = vpop.f32.mrb[0].mxu0
        %v1740 = vadd.f32 %v1623, %v1739
        %v1741 = vpop.f32.mrb[0].mxu0
        %v1742 = vpop.f32.mrb[0].mxu0
        %v1743 = vadd.f32 %v1623, %v1742
        %v1744 = vpop.f32.mrb[0].mxu0
        %1745 = vmatprep.mubr.bf16.mxu0 0
        %1746 = vmatmul.mubr.bf16.gmra.mrb[0].mxu0 %v1656
        %v1747 = vpop.f32.mrb[0].mxu0
        %v1748 = vadd.f32 %v1623, %v1747
        %v1749 = vpop.f32.mrb[0].mxu0
        %v1750 = vpop.f32.mrb[0].mxu0
        %v1751 = vadd.f32 %v1623, %v1750
        %v1752 = vpop.f32.mrb[0].mxu0
        %1753 = vmatprep.mubr.bf16.mxu0 0
        %1754 = vmatmul.mubr.bf16.gmra.mrb[0].mxu0 %v1659
        %v1755 = vpop.f32.mrb[0].mxu0
        %v1756 = vadd.f32 %v1623, %v1755
        %v1757 = vpop.f32.mrb[0].mxu0
        %v1758 = vpop.f32.mrb[0].mxu0
        %v1759 = vadd.f32 %v1623, %v1758
        %v1760 = vpop.f32.mrb[0].mxu0
        %1761 = vmatprep.mubr.bf16.mxu0 0
        %1762 = vmatmul.mubr.bf16.gmra.mrb[0].mxu0 %v1662
        %v1763 = vpop.f32.mrb[0].mxu0
        %v1764 = vadd.f32 %v1623, %v1763
        %v1765 = vpop.f32.mrb[0].mxu0
        %v1766 = vpop.f32.mrb[0].mxu0
        %v1767 = vadd.f32 %v1623, %v1766
        %v1768 = vpop.f32.mrb[0].mxu0
        %1769 = vmatprep.mubr.bf16.mxu0 0
        %1770 = vmatmul.mubr.bf16.gmra.mrb[0].mxu0 %v1665
        %v1771 = vpop.f32.mrb[0].mxu0
        %v1772 = vadd.f32 %v1623, %v1771
        %v1773 = vpop.f32.mrb[0].mxu0
        %v1774 = vpop.f32.mrb[0].mxu0
        %v1775 = vadd.f32 %v1623, %v1774
        %v1776 = vpop.f32.mrb[0].mxu0
        %1777 = vmatprep.mubr.bf16.mxu0 0
        %1778 = vmatmul.mubr.bf16.gmra.mrb[0].mxu0 %v1668
        %v1779 = vpop.f32.mrb[0].mxu0
        %v1780 = vadd.f32 %v1623, %v1779
        %v1781 = vpop.f32.mrb[0].mxu0
        %v1782 = vpop.f32.mrb[0].mxu0
        %v1783 = vadd.f32 %v1623, %v1782
        %v1784 = vpop.f32.mrb[0].mxu0
        %1785 = vmatprep.mubr.bf16.mxu0 0
        %1786 = vmatmul.mubr.bf16.gmra.mrb[0].mxu0 %v1671
        %v1787 = vpop.f32.mrb[0].mxu0
        %v1788 = vadd.f32 %v1623, %v1787
        %v1789 = vpop.f32.mrb[0].mxu0
        %v1790 = vpop.f32.mrb[0].mxu0
        %v1791 = vadd.f32 %v1623, %v1790
        %v1792 = vpop.f32.mrb[0].mxu0
        %1793 = vmatprep.mubr.bf16.mxu0 0
        %1794 = vmatmul.mubr.bf16.gmra.mrb[0].mxu0 %v1674
        %v1795 = vpop.f32.mrb[0].mxu0
        %v1796 = vadd.f32 %v1623, %v1795
        %v1797 = vpop.f32.mrb[0].mxu0
        %v1798 = vpop.f32.mrb[0].mxu0
        %v1799 = vadd.f32 %v1623, %v1798
        %v1800 = vpop.f32.mrb[0].mxu0
        %1801 = vmatprep.mubr.bf16.mxu0 0
        %1802 = vmatmul.mubr.bf16.gmra.mrb[0].mxu0 %v1677
        %v1803 = vpop.f32.mrb[0].mxu0
        %v1804 = vadd.f32 %v1623, %v1803
        %v1805 = vpop.f32.mrb[0].mxu0
        %v1806 = vpop.f32.mrb[0].mxu0
        %v1807 = vadd.f32 %v1623, %v1806
        %v1808 = vpop.f32.mrb[0].mxu0
        %1809 = vmatprep.mubr.bf16.mxu0 0
        %1810 = vmatmul.mubr.bf16.gmra.mrb[0].mxu0 %v1680
        %v1811 = vpop.f32.mrb[0].mxu0
        %v1812 = vadd.f32 %v1623, %v1811
        %v1813 = vpop.f32.mrb[0].mxu0
        %v1814 = vpop.f32.mrb[0].mxu0
        %v1815 = vadd.f32 %v1623, %v1814
        %v1816 = vpop.f32.mrb[0].mxu0
        %1817 = vmatprep.mubr.bf16.mxu0 0
        %1818 = vmatmul.mubr.bf16.gmra.mrb[0].mxu0 %v1683
        %v1819 = vpop.f32.mrb[0].mxu0
        %v1820 = vadd.f32 %v1623, %v1819
        %v1821 = vpop.f32.mrb[0].mxu0
        %v1822 = vpop.f32.mrb[0].mxu0
        %v1823 = vadd.f32 %v1623, %v1822
        %v1824 = vpop.f32.mrb[0].mxu0
        %1825 = vmatprep.mubr.bf16.mxu0 0
        %1826 = vmatmul.mubr.bf16.gmra.mrb[0].mxu0 %v1686
        %v1827 = vpop.f32.mrb[0].mxu0
        %v1828 = vadd.f32 %v1623, %v1827
        %v1829 = vpop.f32.mrb[0].mxu0
        %v1830 = vpop.f32.mrb[0].mxu0
        %v1831 = vadd.f32 %v1623, %v1830
        %v1832 = vpop.f32.mrb[0].mxu0
        %1833 = vmatprep.mubr.bf16.mxu0 0
        %1834 = vmatmul.mubr.bf16.gmra.mrb[0].mxu0 %v1689
        %v1835 = vpop.f32.mrb[0].mxu0
        %v1836 = vadd.f32 %v1623, %v1835
        %v1837 = vpop.f32.mrb[0].mxu0
        %v1838 = vpop.f32.mrb[0].mxu0
        %v1839 = vadd.f32 %v1623, %v1838
        %v1840 = vpop.f32.mrb[0].mxu0
        %1841 = vmatprep.mubr.bf16.mxu0 0
        %1842 = vmatmul.mubr.bf16.gmra.mrb[0].mxu0 %v1692
        %v1843 = vpop.f32.mrb[0].mxu0
        %v1844 = vadd.f32 %v1623, %v1843
        %v1845 = vpop.f32.mrb[0].mxu0
        %v1846 = vpop.f32.mrb[0].mxu0
        %v1847 = vadd.f32 %v1623, %v1846
        %v1848 = vpop.f32.mrb[0].mxu0
        %1849 = vmatprep.mubr.bf16.mxu0 0
        %1850 = vmatmul.mubr.bf16.gmra.mrb[0].mxu0 %v1695
        %v1851 = vpop.f32.mrb[0].mxu0
        %v1852 = vadd.f32 %v1623, %v1851
        %v1853 = vpop.f32.mrb[0].mxu0
        %v1854 = vpop.f32.mrb[0].mxu0
        %v1855 = vadd.f32 %v1623, %v1854
        %v1856 = vpop.f32.mrb[0].mxu0
        %1857 = vdwg.mxu0
        %v1858 = vadd.f32 %v1732, %v376
        %v1859 = vadd.f32 %v1735, %v377
        %v1860 = vadd.f32 %v1740, %v378
        %v1861 = vadd.f32 %v1743, %v379
        %v1862 = vadd.f32 %v1748, %v380
        %v1863 = vadd.f32 %v1751, %v381
        %v1864 = vadd.f32 %v1756, %v382
        %v1865 = vadd.f32 %v1759, %v383
        %v1866 = vadd.f32 %v1764, %v384
        %v1867 = vadd.f32 %v1767, %v385
        %v1868 = vadd.f32 %v1772, %v386
        %v1869 = vadd.f32 %v1775, %v387
        %v1870 = vadd.f32 %v1780, %v388
        %v1871 = vadd.f32 %v1783, %v389
        %v1872 = vadd.f32 %v1788, %v390
        %v1873 = vadd.f32 %v1791, %v391
        %v1874 = vadd.f32 %v1796, %v392
        %v1875 = vadd.f32 %v1799, %v393
        %v1876 = vadd.f32 %v1804, %v394
        %v1877 = vadd.f32 %v1807, %v395
        %v1878 = vadd.f32 %v1812, %v396
        %v1879 = vadd.f32 %v1815, %v397
        %v1880 = vadd.f32 %v1820, %v398
        %v1881 = vadd.f32 %v1823, %v399
        %v1882 = vadd.f32 %v1828, %v400
        %v1883 = vadd.f32 %v1831, %v401
        %v1884 = vadd.f32 %v1836, %v402
        %v1885 = vadd.f32 %v1839, %v403
        %v1886 = vadd.f32 %v1844, %v404
        %v1887 = vadd.f32 %v1847, %v405
        %v1888 = vadd.f32 %v1852, %v406
        %v1889 = vadd.f32 %v1855, %v407
        %1890 = vst [vmem:[%s353] sm:$0xff] %v1858
        %1891 = vst [vmem:[%s353 + $0x8] sm:$0xff] %v1859
        %1892 = vst [vmem:[%s353 + $0x10] sm:$0xff] %v1860
        %1893 = vst [vmem:[%s353 + $0x18] sm:$0xff] %v1861
        %1894 = vst [vmem:[%s353 + $0x20] sm:$0xff] %v1862
        %1895 = vst [vmem:[%s353 + $0x28] sm:$0xff] %v1863
        %1896 = vst [vmem:[%s353 + $0x30] sm:$0xff] %v1864
        %1897 = vst [vmem:[%s353 + $0x38] sm:$0xff] %v1865
        %1898 = vst [vmem:[%s353 + $0x40] sm:$0xff] %v1866
        %1899 = vst [vmem:[%s353 + $0x48] sm:$0xff] %v1867
        %1900 = vst [vmem:[%s353 + $0x50] sm:$0xff] %v1868
        %1901 = vst [vmem:[%s353 + $0x58] sm:$0xff] %v1869
        %1902 = vst [vmem:[%s353 + $0x60] sm:$0xff] %v1870
        %1903 = vst [vmem:[%s353 + $0x68] sm:$0xff] %v1871
        %1904 = vst [vmem:[%s353 + $0x70] sm:$0xff] %v1872
        %1905 = vst [vmem:[%s353 + $0x78] sm:$0xff] %v1873
        %1906 = vst [vmem:[%s353 + $0x80] sm:$0xff] %v1874
        %1907 = vst [vmem:[%s353 + $0x88] sm:$0xff] %v1875
        %1908 = vst [vmem:[%s353 + $0x90] sm:$0xff] %v1876
        %1909 = vst [vmem:[%s353 + $0x98] sm:$0xff] %v1877
        %1910 = vst [vmem:[%s353 + $0xa0] sm:$0xff] %v1878
        %1911 = vst [vmem:[%s353 + $0xa8] sm:$0xff] %v1879
        %1912 = vst [vmem:[%s353 + $0xb0] sm:$0xff] %v1880
        %1913 = vst [vmem:[%s353 + $0xb8] sm:$0xff] %v1881
        %1914 = vst [vmem:[%s353 + $0xc0] sm:$0xff] %v1882
        %1915 = vst [vmem:[%s353 + $0xc8] sm:$0xff] %v1883
        %1916 = vst [vmem:[%s353 + $0xd0] sm:$0xff] %v1884
        %1917 = vst [vmem:[%s353 + $0xd8] sm:$0xff] %v1885
        %1918 = vst [vmem:[%s353 + $0xe0] sm:$0xff] %v1886
        %1919 = vst [vmem:[%s353 + $0xe8] sm:$0xff] %v1887
        %1920 = vst [vmem:[%s353 + $0xf0] sm:$0xff] %v1888
        %1921 = vst [vmem:[%s353 + $0xf8] sm:$0xff] %v1889
        %s1922 = sand.u32 %s229, 1
        %s1923 = scalar_lea.sflag [#allocation3], %s1922
        %s1924 = sand.u32 %s229, 1
        %s1925 = smul.addr %s1924, 256
        %s1926 = scalar_lea.vmem [#allocation2], %s1925
        // Predicated region
        $region53: #{nonlocal_block_2d.1} parent=51 // pred_check
          %p1927 = pneg %p239
        $region54: #{nonlocal_block_2d.1} parent=51 // pred_check_branch
          %1929 = sbr.rel (%p1927) target = $region56
        $region55: #{nonlocal_block_2d.1} parent=51 // pred_region
          %s1930 = smul.u32 32, %s27
          %s1932 = ssub.s32 4096, 4096
          %1933 = vsyncadd %s1923, %s1932
          %s1934 = smul.addr %s26, 32
          %s1935 = sadd.s32 %s1930, %s1934
          %s1936 = smul.addr %s1935, 128
          %s1937 = scalar_lea.hbm %s8, %s1936
          %s1938 = sshll.u32 %s1926, 4
          %s1939 = int_to_ptr.vmem [resolvable:$true] %s1938
          %1944 = dma.vmem_to_hbm [thread:$0]  %s1939, 4096, %s1937, %s1923, 128, 128, 8
        $region56: #{nonlocal_block_2d.1} parent=51 // pred_fallthru
          _
      $region52: #{nonlocal_block_2d.1} parent=5 // pred_fallthru
        _
      %p1945 = scmp.le.s32.totalorder 2, %s17
      // Predicated region
      $region57: #{nonlocal_block_2d.1} parent=5 // pred_check
        %p1946 = pneg %p1945
      $region58: #{nonlocal_block_2d.1} parent=5 // pred_check_branch
        %1948 = sbr.rel (%p1946) target = $region60
      $region59: #{nonlocal_block_2d.1} parent=5 // pred_region
        %s1949 = ssub.s32 %s17, 2
        // Predicated region
        $region61: #{nonlocal_block_2d.1} parent=59 // pred_check
          %p1950 = pneg %p245
        $region62: #{nonlocal_block_2d.1} parent=59 // pred_check_branch
          %1952 = sbr.rel (%p1950) target = $region64
        $region63: #{nonlocal_block_2d.1} parent=59 // pred_region
          %s1953 = sand.u32 %s230, 1
          %s1954 = scalar_lea.sflag [#allocation3], %s1953
          %s1955 = sand.u32 %s230, 1
          %s1956 = smul.addr %s1955, 256
          %s1957 = scalar_lea.vmem [#allocation2], %s1956
          %1958 = dma.done %s1954, 4096
        $region64: #{nonlocal_block_2d.1} parent=59 // pred_fallthru
          _
      $region60: #{nonlocal_block_2d.1} parent=5 // pred_fallthru
        _
    $region6: #{nonlocal_block_2d.1} parent=1 // loop_footer
      %s21 = sadd.s32 1, %s17
    $region7: #{nonlocal_block_2d.1} parent=1 // loop_footer_branch
      %16 = sbr.rel target = $region3
    $region8: #{nonlocal_block_2d.1} parent=1 // loop_exit
      _
    %1959 = vsyncpa [#allocation3], 1
    %s1960 = scalar_lea.sflag [#allocation3], 1
    %1961 = vsyncpa %s1960, 1

</llo_original>
